<compile_context>
chip_gen: v6e
topology: v6e:2x2x1
jax: 0.10.0
libtpu: 0.0.40
codegen_flags: <defaults>
</compile_context>

<pallas_src>
import functools

import jax
import jax.numpy as jnp
from jax.experimental import pallas as pl
from jax.experimental.pallas import tpu as pltpu


# --------------------------------------------------------------------------- #
# Shared math: attention maps from pooled features (pure jnp, usable both
# inside a Pallas kernel and as a plain XLA stage)
# --------------------------------------------------------------------------- #
def _attention_maps(pooled, mx, w1t, b1, w2t, b2,
                    c1_w, c1_b, bn_g, bn_b, ch_w, ch_b, cw_w, cw_b, h):
    """pooled: (N, C, H+W) f32; mx: (N, C) f32 -> a_h (N, oup, H), a_w (N, oup, W)."""
    n = pooled.shape[0]

    # ---- ChannelAttentionModule: shared MLP fused over {avg, max} ----
    avg = jnp.mean(pooled[:, :, :h], axis=2)                 # (N, C) == mean over H,W
    stacked = jnp.concatenate([avg, mx], axis=0)             # (2N, C)
    hid = jnp.maximum(
        jnp.dot(stacked, w1t, preferred_element_type=jnp.float32) + b1, 0.0)
    z = jnp.dot(hid, w2t, preferred_element_type=jnp.float32) + b2   # (2N, C)
    ca = jax.nn.sigmoid(z[:n] + z[n:])                        # (N, C)

    # Channel attention folded into pooled features: mean(ca*x) == ca*mean(x).
    y = pooled * ca[:, :, None]                               # (N, C, H+W)

    # ---- conv1 (1x1) + BatchNorm2d (training-mode) + h_swish ----
    y1 = jnp.einsum('ncl,mc->nml', y, c1_w,
                    preferred_element_type=jnp.float32) + c1_b[:, :, None]
    mean = jnp.mean(jnp.mean(y1, axis=2, keepdims=True), axis=0, keepdims=True)
    d = y1 - mean
    var = jnp.mean(jnp.mean(d * d, axis=2, keepdims=True), axis=0, keepdims=True)
    yn = d * jax.lax.rsqrt(var + 1e-5) * bn_g[:, :, None] + bn_b[:, :, None]
    ya = yn * jnp.clip(yn + 3.0, 0.0, 6.0) * (1.0 / 6.0)      # h_swish

    a_h = jax.nn.sigmoid(jnp.einsum('nml,om->nol', ya[:, :, :h], ch_w,
                                    preferred_element_type=jnp.float32)
                         + ch_b[:, :, None])                  # (N, oup, H)
    a_w = jax.nn.sigmoid(jnp.einsum('nml,om->nol', ya[:, :, h:], cw_w,
                                    preferred_element_type=jnp.float32)
                         + cw_b[:, :, None])                  # (N, oup, W)
    return a_h, a_w


# --------------------------------------------------------------------------- #
# Fused single-kernel path (x resident in VMEM; HBM traffic = read x + write out)
# --------------------------------------------------------------------------- #
def _fused_kernel(x_ref, p_ref, e_ref,
                  w1t_ref, b1_ref, w2t_ref, b2_ref,
                  c1_w_ref, c1_b_ref, bn_g_ref, bn_b_ref,
                  ch_w_ref, ch_b_ref, cw_w_ref, cw_b_ref,
                  out_ref, *, h):
    x = x_ref[...].astype(jnp.float32)                       # (N, C, H*W)
    # [mean over W per h | mean over H per w] as one stacked MXU matmul.
    pooled = jnp.einsum('ncl,lk->nck', x, p_ref[...],
                        preferred_element_type=jnp.float32)  # (N, C, H+W)
    mx = jnp.max(x, axis=-1)                                  # (N, C)
    a_h, a_w = _attention_maps(
        pooled, mx, w1t_ref[...], b1_ref[...], w2t_ref[...], b2_ref[...],
        c1_w_ref[...], c1_b_ref[...], bn_g_ref[...], bn_b_ref[...],
        ch_w_ref[...], ch_b_ref[...], cw_w_ref[...], cw_b_ref[...], h)
    # Expand to lane-dense (N, C, H*W) with tiny 0/1 matmuls on the idle MXU.
    ah_exp = jnp.einsum('nch,hl->ncl', a_h, e_ref[:h, :],
                        preferred_element_type=jnp.float32)
    aw_exp = jnp.einsum('ncw,wl->ncl', a_w, e_ref[h:, :],
                        preferred_element_type=jnp.float32)
    out_ref[...] = (x * ah_exp * aw_exp).astype(out_ref.dtype)


# --------------------------------------------------------------------------- #
# Tiled path — stage 1: pooling (lane-dense 128-wide output, max folded in)
# --------------------------------------------------------------------------- #
def _pool_kernel(x_ref, p_ref, pooled_ref, *, max_col):
    x2 = x_ref[0].astype(jnp.float32)                         # (ct, H*W) lane-dense
    pooled = jnp.dot(x2, p_ref[...],
                     preferred_element_type=jnp.float32)      # (ct, Lp) Lp>=128
    mx = jnp.max(x2, axis=-1, keepdims=True)                  # (ct, 1)
    col = jax.lax.broadcasted_iota(jnp.int32, pooled.shape, 1)
    # Fold the channel-attention max into the (zero-padded) column `max_col`
    # so the only store is one unmasked, lane-dense vst.
    pooled_ref[0] = jnp.where(col == max_col, mx, pooled)


# --------------------------------------------------------------------------- #
# Tiled path — stage 3: apply attention (lane-dense elementwise pass)
# --------------------------------------------------------------------------- #
def _apply_kernel(x_ref, ahw_ref, e_ref, out_ref, *, split):
    ahw = ahw_ref[0]                                          # (ct, H+W)
    ah_exp = jnp.dot(ahw[:, :split], e_ref[:split, :],
                     preferred_element_type=jnp.float32)      # (ct, H*W)
    aw_exp = jnp.dot(ahw[:, split:], e_ref[split:, :],
                     preferred_element_type=jnp.float32)
    out_ref[0] = (x_ref[0].astype(jnp.float32) * ah_exp * aw_exp).astype(out_ref.dtype)


# --------------------------------------------------------------------------- #
# Wrapper helpers
# --------------------------------------------------------------------------- #
def _vmem_limit_bytes():
    """Generation-aware VMEM budget: ~3/4 of physical VMEM, capped at 96 MiB."""
    cap = 64 << 20                                   # conservative (v7x) fallback
    try:
        cap = int(getattr(pltpu.get_tpu_info(), "vmem_capacity_bytes", cap))
    except Exception:
        pass
    return int(min(cap * 3 // 4, 96 << 20))          # v7x -> 48 MiB, v5e/v6e -> 96 MiB


def _choose_c_tile(N, C, HW, block_budget, bytes_per_elem=4):
    """Largest channel tile whose (ct, H*W) block fits the budget, without ever
    falling back to an untiled-C block that could blow VMEM, and keeping enough
    grid steps for the double-buffered pipeline (and v7x's two TensorCores)."""
    cands = sorted({d for d in range(8, C + 1, 8) if C % d == 0} | {C})
    fits = [d for d in cands if d * HW * bytes_per_elem <= block_budget]
    # TODO(synk): if even the smallest channel tile exceeds the budget (huge H*W),
    # tile the H*W axis as well (stage 1 then needs a pooled accumulator).
    ct = max(fits) if fits else min(cands)
    while N * (C // ct) < 4:
        smaller = [d for d in cands if d < ct]
        if not smaller:
            break
        ct = max(smaller)
    return ct


# --------------------------------------------------------------------------- #
# Wrapper
# --------------------------------------------------------------------------- #
def coord_att(x, params, *, force_tiled=False):
    N, C, H, W = x.shape
    HW, L = H * W, H + W
    oup = params['ch_w'].shape[0]
    assert oup == C, "the broadcast multiply in forward() requires oup == inp"

    x_flat = x.reshape(N, C, HW)                              # lane-dense view (free)

    # Constant pooling / expansion matrices (built once, outside the kernels).
    lidx = jnp.arange(HW)
    oh_h = (lidx[:, None] // W == jnp.arange(H)[None, :]).astype(jnp.float32)  # (HW,H)
    oh_w = (lidx[:, None] % W == jnp.arange(W)[None, :]).astype(jnp.float32)   # (HW,W)
    P = jnp.concatenate([oh_h / W, oh_w / H], axis=1)         # (HW, H+W)
    E = jnp.concatenate([oh_h.T, oh_w.T], axis=0)             # (H+W, HW)

    # Pre-transposed MLP weights so the kernels do no in-kernel transposes.
    w1t = params['ca_w1'].T                                   # (C, mid)
    w2t = params['ca_w2'].T                                   # (mid, C)

    vmem_limit = _vmem_limit_bytes()
    x_bytes = N * C * HW * 4

    # ---- fused path: x (f32) + out + a_h/a_w expansions all resident in VMEM ----
    if (not force_tiled) and (6 * x_bytes + 8 * HW * L * 4 <= vmem_limit):
        vmem = pl.BlockSpec(memory_space=pltpu.MemorySpace.VMEM)
        out_flat = pl.pallas_call(
            functools.partial(_fused_kernel, h=H),
            in_specs=[vmem] * 15,
            out_specs=vmem,
            out_shape=jax.ShapeDtypeStruct((N, C, HW), x.dtype),
            compiler_params=pltpu.CompilerParams(vmem_limit_bytes=vmem_limit),
        )(x_flat, P, E,
          w1t, params['ca_b1'], w2t, params['ca_b2'],
          params['c1_w'], params['c1_b'], params['bn_g'], params['bn_b'],
          params['ch_w'], params['ch_b'], params['cw_w'], params['cw_b'])
        return out_flat.reshape(N, C, H, W)

    # ---- tiled path ----
    # Budget per (ct, H*W) block: stage 3 double-buffers x and out (4 blocks live),
    # plus the small a_hw / E / P constants -> ~vmem_limit / 8 per block.
    block_budget = vmem_limit // 8
    ct = _choose_c_tile(N, C, HW, block_budget)
    grid = (N, C // ct)
    par2 = pltpu.CompilerParams(dimension_semantics=("parallel", "parallel"),
                                vmem_limit_bytes=vmem_limit)

    # Stage 1: pooling.  Output padded to a lane-dense 128-multiple width; the
    # per-channel max lives in column L of the same block.
    Lp = ((L + 1 + 127) // 128) * 128
    P_pad = jnp.pad(P, ((0, 0), (0, Lp - L)))
    pooled_pad = pl.pallas_call(
        functools.partial(_pool_kernel, max_col=L),
        grid=grid,
        in_specs=[pl.BlockSpec((1, ct, HW), lambda n, c: (n, c, 0)),
                  pl.BlockSpec((HW, Lp), lambda n, c: (0, 0))],
        out_specs=pl.BlockSpec((1, ct, Lp), lambda n, c: (n, c, 0)),
        out_shape=jax.ShapeDtypeStruct((N, C, Lp), jnp.float32),
        compiler_params=par2,
    )(x_flat, P_pad)

    # Stage 2: attention maps as plain jnp (few-KiB working set; no kernel launch).
    pooled = pooled_pad[:, :, :L]
    mx = pooled_pad[:, :, L]
    a_h, a_w = _attention_maps(
        pooled, mx, w1t, params['ca_b1'], w2t, params['ca_b2'],
        params['c1_w'], params['c1_b'], params['bn_g'], params['bn_b'],
        params['ch_w'], params['ch_b'], params['cw_w'], params['cw_b'], H)
    a_hw = jnp.concatenate([a_h, a_w], axis=2)                # (N, C, H+W): one DMA/step

    # Stage 3: apply.
    out_flat = pl.pallas_call(
        functools.partial(_apply_kernel, split=H),
        grid=grid,
        in_specs=[pl.BlockSpec((1, ct, HW), lambda n, c: (n, c, 0)),
                  pl.BlockSpec((1, ct, L), lambda n, c: (n, c, 0)),
                  pl.BlockSpec((L, HW), lambda n, c: (0, 0))],
        out_specs=pl.BlockSpec((1, ct, HW), lambda n, c: (n, c, 0)),
        out_shape=jax.ShapeDtypeStruct((N, C, HW), x.dtype),
        compiler_params=par2,
    )(x_flat, a_hw, E)

    return out_flat.reshape(N, C, H, W)


# --------------------------------------------------------------------------- #
# Parameters / pure-JAX reference
# --------------------------------------------------------------------------- #
def init_params(key, inp, oup, reduction=32, ca_reduction=16):
    mip = max(8, inp // reduction)          # CoordAtt mid channels
    mid = inp // ca_reduction               # ChannelAttention MLP hidden width
    assert mid >= 1, "inp must be >= ca_reduction"
    ks = jax.random.split(key, 10)

    def w(k, shape, scale=0.1):
        return scale * jax.random.normal(k, shape, jnp.float32)

    return dict(
        ca_w1=w(ks[0], (mid, inp)), ca_b1=w(ks[1], (1, mid)),
        ca_w2=w(ks[2], (inp, mid)), ca_b2=w(ks[3], (1, inp)),
        c1_w=w(ks[4], (mip, inp)), c1_b=w(ks[5], (1, mip)),
        bn_g=jnp.ones((1, mip), jnp.float32), bn_b=jnp.zeros((1, mip), jnp.float32),
        ch_w=w(ks[6], (oup, mip)), ch_b=w(ks[7], (1, oup)),
        cw_w=w(ks[8], (oup, mip)), cw_b=w(ks[9], (1, oup)),
    )


def coord_att_ref(x, params):
    """Direct JAX transcription of the PyTorch forward (for validation only)."""
    N, C, H, W = x.shape
    avg = jnp.mean(x, axis=(2, 3))
    mxp = jnp.max(x, axis=(2, 3))

    def mlp(v):
        h1 = jnp.maximum(v @ params['ca_w1'].T + params['ca_b1'], 0.0)
        return h1 @ params['ca_w2'].T + params['ca_b2']

    ca = jax.nn.sigmoid(mlp(avg) + mlp(mxp))
    xs = x * ca[:, :, None, None]
    x_h = jnp.mean(xs, axis=3)
    x_w = jnp.mean(xs, axis=2)
    y = jnp.concatenate([x_h, x_w], axis=2)
    y1 = jnp.einsum('ncl,mc->nml', y, params['c1_w']) + params['c1_b'][:, :, None]
    mean = jnp.mean(y1, axis=(0, 2), keepdims=True)
    var = jnp.mean((y1 - mean) ** 2, axis=(0, 2), keepdims=True)
    yn = (y1 - mean) * jax.lax.rsqrt(var + 1e-5) * params['bn_g'][:, :, None] \
         + params['bn_b'][:, :, None]
    ya = yn * jnp.clip(yn + 3.0, 0.0, 6.0) / 6.0
    yh, yw = ya[:, :, :H], ya[:, :, H:]
    a_h = jax.nn.sigmoid(jnp.einsum('nml,om->nol', yh, params['ch_w'])
                         + params['ch_b'][:, :, None])
    a_w = jax.nn.sigmoid(jnp.einsum('nml,om->nol', yw, params['cw_w'])
                         + params['cw_b'][:, :, None])
    return x * a_w[:, :, None, :] * a_h[:, :, :, None]


if __name__ == "__main__":
    # inp = oup = 32 so the channel-attention MLP (reduction=16) has hidden width >= 1.
    N, C, H, W = 2, 32, 16, 16
    key = jax.random.PRNGKey(0)
    kx, kp = jax.random.split(key)
    x = jax.random.normal(kx, (N, C, H, W), jnp.float32)
    params = init_params(kp, inp=C, oup=C, reduction=32, ca_reduction=16)

    ref = jax.block_until_ready(coord_att_ref(x, params))

    # Fused (VMEM-resident) path — the default dispatch at this size.
    fused_fn = jax.jit(coord_att)
    out_fused = jax.block_until_ready(fused_fn(x, params))
    assert out_fused.shape == (N, C, H, W) and out_fused.dtype == jnp.float32
    err_f = float(jnp.max(jnp.abs(out_fused - ref)))
    # Loose tolerance: default-precision f32 MXU matmuls inside the kernel vs the
    # exact-mean reference; structural bugs would show O(0.1..1) errors.
    assert bool(jnp.allclose(out_fused, ref, atol=3e-2, rtol=3e-2)), err_f

    # Tiled (grid) path — exercised explicitly so the large-shape path is validated.
    tiled_fn = jax.jit(functools.partial(coord_att, force_tiled=True))
    out_tiled = jax.block_until_ready(tiled_fn(x, params))
    err_t = float(jnp.max(jnp.abs(out_tiled - ref)))
    assert bool(jnp.allclose(out_tiled, ref, atol=3e-2, rtol=3e-2)), err_t

    print("KERNEL_OK")
</pallas_src>

<mosaic_0001>
module attributes {stable_mosaic.version = 11 : i64} {
  func.func @_fused_kernel(%arg0: memref<2x32x256xf32, #tpu.memory_space<vmem>>, %arg1: memref<256x32xf32, #tpu.memory_space<vmem>>, %arg2: memref<32x256xf32, #tpu.memory_space<vmem>>, %arg3: memref<32x2xf32, #tpu.memory_space<vmem>>, %arg4: memref<1x2xf32, #tpu.memory_space<vmem>>, %arg5: memref<2x32xf32, #tpu.memory_space<vmem>>, %arg6: memref<1x32xf32, #tpu.memory_space<vmem>>, %arg7: memref<8x32xf32, #tpu.memory_space<vmem>>, %arg8: memref<1x8xf32, #tpu.memory_space<vmem>>, %arg9: memref<1x8xf32, #tpu.memory_space<vmem>>, %arg10: memref<1x8xf32, #tpu.memory_space<vmem>>, %arg11: memref<32x8xf32, #tpu.memory_space<vmem>>, %arg12: memref<1x32xf32, #tpu.memory_space<vmem>>, %arg13: memref<32x8xf32, #tpu.memory_space<vmem>>, %arg14: memref<1x32xf32, #tpu.memory_space<vmem>>, %arg15: memref<2x32x256xf32, #tpu.memory_space<vmem>>) attributes {dimension_semantics = [], scalar_prefetch = 0 : i64, scratch_operands = 0 : i64, tpu.core_type = #tpu.core_type<tc>} {
    %c0 = arith.constant 0 : index
    %c0_0 = arith.constant 0 : index
    %c0_1 = arith.constant 0 : index
    %0 = vector.load %arg0[%c0, %c0_0, %c0_1] : memref<2x32x256xf32, #tpu.memory_space<vmem>>, vector<2x32x256xf32>
    %c0_2 = arith.constant 0 : index
    %c0_3 = arith.constant 0 : index
    %1 = vector.load %arg1[%c0_2, %c0_3] : memref<256x32xf32, #tpu.memory_space<vmem>>, vector<256x32xf32>
    "tpu.trace_start"() <{level = 10 : i32, message = "ncl,lk->nck"}> : () -> ()
    %cst = arith.constant dense<0.000000e+00> : vector<2x32x32xf32>
    %2 = tpu.matmul %0, %1, %cst {dimension_numbers = #tpu.dot_dimension_numbers<[2], [0], [0, 1], [1], [0, 0, 0, 1, 1, 1], [], []>} : vector<2x32x256xf32>, vector<256x32xf32>, vector<2x32x32xf32> -> vector<2x32x32xf32>
    "tpu.trace_stop"() : () -> ()
    %cst_4 = arith.constant dense<0xFF800000> : vector<2x32xf32>
    %3 = vector.multi_reduction <maximumf>, %0, %cst_4 [2] : vector<2x32x256xf32> to vector<2x32xf32>
    %c0_5 = arith.constant 0 : index
    %c0_6 = arith.constant 0 : index
    %4 = vector.load %arg3[%c0_5, %c0_6] : memref<32x2xf32, #tpu.memory_space<vmem>>, vector<32x2xf32>
    %c0_7 = arith.constant 0 : index
    %c0_8 = arith.constant 0 : index
    %5 = vector.load %arg4[%c0_7, %c0_8] : memref<1x2xf32, #tpu.memory_space<vmem>>, vector<1x2xf32>
    %c0_9 = arith.constant 0 : index
    %c0_10 = arith.constant 0 : index
    %6 = vector.load %arg5[%c0_9, %c0_10] : memref<2x32xf32, #tpu.memory_space<vmem>>, vector<2x32xf32>
    %c0_11 = arith.constant 0 : index
    %c0_12 = arith.constant 0 : index
    %7 = vector.load %arg6[%c0_11, %c0_12] : memref<1x32xf32, #tpu.memory_space<vmem>>, vector<1x32xf32>
    %c0_13 = arith.constant 0 : index
    %c0_14 = arith.constant 0 : index
    %8 = vector.load %arg7[%c0_13, %c0_14] : memref<8x32xf32, #tpu.memory_space<vmem>>, vector<8x32xf32>
    %c0_15 = arith.constant 0 : index
    %c0_16 = arith.constant 0 : index
    %9 = vector.load %arg8[%c0_15, %c0_16] : memref<1x8xf32, #tpu.memory_space<vmem>>, vector<1x8xf32>
    %c0_17 = arith.constant 0 : index
    %c0_18 = arith.constant 0 : index
    %10 = vector.load %arg9[%c0_17, %c0_18] : memref<1x8xf32, #tpu.memory_space<vmem>>, vector<1x8xf32>
    %c0_19 = arith.constant 0 : index
    %c0_20 = arith.constant 0 : index
    %11 = vector.load %arg10[%c0_19, %c0_20] : memref<1x8xf32, #tpu.memory_space<vmem>>, vector<1x8xf32>
    %c0_21 = arith.constant 0 : index
    %c0_22 = arith.constant 0 : index
    %12 = vector.load %arg11[%c0_21, %c0_22] : memref<32x8xf32, #tpu.memory_space<vmem>>, vector<32x8xf32>
    %c0_23 = arith.constant 0 : index
    %c0_24 = arith.constant 0 : index
    %13 = vector.load %arg12[%c0_23, %c0_24] : memref<1x32xf32, #tpu.memory_space<vmem>>, vector<1x32xf32>
    %c0_25 = arith.constant 0 : index
    %c0_26 = arith.constant 0 : index
    %14 = vector.load %arg13[%c0_25, %c0_26] : memref<32x8xf32, #tpu.memory_space<vmem>>, vector<32x8xf32>
    %c0_27 = arith.constant 0 : index
    %c0_28 = arith.constant 0 : index
    %15 = vector.load %arg14[%c0_27, %c0_28] : memref<1x32xf32, #tpu.memory_space<vmem>>, vector<1x32xf32>
    %16 = vector.extract_strided_slice %2 {offsets = [0, 0, 0], sizes = [2, 32, 16], strides = [1, 1, 1]} : vector<2x32x32xf32> to vector<2x32x16xf32>
    %cst_29 = arith.constant dense<0.000000e+00> : vector<2x32xf32>
    %17 = vector.multi_reduction <add>, %16, %cst_29 [2] : vector<2x32x16xf32> to vector<2x32xf32>
    %cst_30 = arith.constant 1.600000e+01 : f32
    %18 = vector.broadcast %cst_30 : f32 to vector<2x32xf32>
    %19 = arith.divf %17, %18 : vector<2x32xf32>
    %20 = tpu.concatenate %19, %3 in 0 : vector<2x32xf32>, vector<2x32xf32> -> vector<4x32xf32>
    %cst_31 = arith.constant dense<0.000000e+00> : vector<4x2xf32>
    %21 = tpu.matmul %20, %4, %cst_31 {dimension_numbers = #tpu.dot_dimension_numbers<[1], [0], [0], [1], [0, 0, 1, 1], [], []>} : vector<4x32xf32>, vector<32x2xf32>, vector<4x2xf32> -> vector<4x2xf32>
    %22 = vector.broadcast %5 : vector<1x2xf32> to vector<4x2xf32>
    %23 = arith.addf %21, %22 : vector<4x2xf32>
    %cst_32 = arith.constant 0.000000e+00 : f32
    %24 = vector.broadcast %cst_32 : f32 to vector<4x2xf32>
    %25 = arith.maximumf %23, %24 : vector<4x2xf32>
    %cst_33 = arith.constant dense<0.000000e+00> : vector<4x32xf32>
    %26 = tpu.matmul %25, %6, %cst_33 {dimension_numbers = #tpu.dot_dimension_numbers<[1], [0], [0], [1], [0, 0, 1, 1], [], []>} : vector<4x2xf32>, vector<2x32xf32>, vector<4x32xf32> -> vector<4x32xf32>
    %27 = vector.broadcast %7 : vector<1x32xf32> to vector<4x32xf32>
    %28 = arith.addf %26, %27 : vector<4x32xf32>
    %29 = vector.extract_strided_slice %28 {offsets = [0, 0], sizes = [2, 32], strides = [1, 1]} : vector<4x32xf32> to vector<2x32xf32>
    %30 = vector.extract_strided_slice %28 {offsets = [2, 0], sizes = [2, 32], strides = [1, 1]} : vector<4x32xf32> to vector<2x32xf32>
    %31 = arith.addf %29, %30 : vector<2x32xf32>
    %32 = arith.negf %31 : vector<2x32xf32>
    %33 = math.exp %32 : vector<2x32xf32>
    %cst_34 = arith.constant 1.000000e+00 : f32
    %34 = vector.broadcast %cst_34 : f32 to vector<2x32xf32>
    %35 = arith.addf %34, %33 : vector<2x32xf32>
    %36 = arith.divf %34, %35 : vector<2x32xf32>
    %37 = vector.shape_cast %36 : vector<2x32xf32> to vector<2x32x1xf32>
    %38 = vector.broadcast %37 : vector<2x32x1xf32> to vector<2x32x32xf32>
    %39 = arith.mulf %2, %38 : vector<2x32x32xf32>
    "tpu.trace_start"() <{level = 10 : i32, message = "ncl,mc->nml"}> : () -> ()
    %cst_35 = arith.constant dense<0.000000e+00> : vector<8x2x32xf32>
    %40 = tpu.matmul %8, %39, %cst_35 {dimension_numbers = #tpu.dot_dimension_numbers<[1], [1], [0], [0, 2], [0, 0, 1, 0, 1, 2], [], []>} : vector<8x32xf32>, vector<2x32x32xf32>, vector<8x2x32xf32> -> vector<8x2x32xf32>
    %41 = tpu.transpose %40, [1, 0, 2] : vector<8x2x32xf32> -> vector<2x8x32xf32>
    "tpu.trace_stop"() : () -> ()
    %42 = vector.shape_cast %9 : vector<1x8xf32> to vector<1x8x1xf32>
    %43 = vector.broadcast %42 : vector<1x8x1xf32> to vector<2x8x32xf32>
    %44 = arith.addf %41, %43 : vector<2x8x32xf32>
    %cst_36 = arith.constant dense<0.000000e+00> : vector<2x8xf32>
    %45 = vector.multi_reduction <add>, %44, %cst_36 [2] : vector<2x8x32xf32> to vector<2x8xf32>
    %46 = vector.shape_cast %45 : vector<2x8xf32> to vector<2x8x1xf32>
    %cst_37 = arith.constant 3.200000e+01 : f32
    %47 = vector.broadcast %cst_37 : f32 to vector<2x8x1xf32>
    %48 = arith.divf %46, %47 : vector<2x8x1xf32>
    %cst_38 = arith.constant dense<0.000000e+00> : vector<8x1xf32>
    %49 = vector.multi_reduction <add>, %48, %cst_38 [0] : vector<2x8x1xf32> to vector<8x1xf32>
    %50 = vector.shape_cast %49 : vector<8x1xf32> to vector<1x8x1xf32>
    %cst_39 = arith.constant 2.000000e+00 : f32
    %51 = vector.broadcast %cst_39 : f32 to vector<1x8x1xf32>
    %52 = arith.divf %50, %51 : vector<1x8x1xf32>
    %53 = vector.broadcast %52 : vector<1x8x1xf32> to vector<2x8x32xf32>
    %54 = arith.subf %44, %53 : vector<2x8x32xf32>
    %55 = arith.mulf %54, %54 : vector<2x8x32xf32>
    %cst_40 = arith.constant dense<0.000000e+00> : vector<2x8xf32>
    %56 = vector.multi_reduction <add>, %55, %cst_40 [2] : vector<2x8x32xf32> to vector<2x8xf32>
    %57 = vector.shape_cast %56 : vector<2x8xf32> to vector<2x8x1xf32>
    %cst_41 = arith.constant 3.200000e+01 : f32
    %58 = vector.broadcast %cst_41 : f32 to vector<2x8x1xf32>
    %59 = arith.divf %57, %58 : vector<2x8x1xf32>
    %cst_42 = arith.constant dense<0.000000e+00> : vector<8x1xf32>
    %60 = vector.multi_reduction <add>, %59, %cst_42 [0] : vector<2x8x1xf32> to vector<8x1xf32>
    %61 = vector.shape_cast %60 : vector<8x1xf32> to vector<1x8x1xf32>
    %cst_43 = arith.constant 2.000000e+00 : f32
    %62 = vector.broadcast %cst_43 : f32 to vector<1x8x1xf32>
    %63 = arith.divf %61, %62 : vector<1x8x1xf32>
    %cst_44 = arith.constant 9.99999974E-6 : f32
    %64 = vector.broadcast %cst_44 : f32 to vector<1x8x1xf32>
    %65 = arith.addf %63, %64 : vector<1x8x1xf32>
    %66 = math.rsqrt %65 : vector<1x8x1xf32>
    %67 = vector.broadcast %66 : vector<1x8x1xf32> to vector<2x8x32xf32>
    %68 = arith.mulf %54, %67 : vector<2x8x32xf32>
    %69 = vector.shape_cast %10 : vector<1x8xf32> to vector<1x8x1xf32>
    %70 = vector.broadcast %69 : vector<1x8x1xf32> to vector<2x8x32xf32>
    %71 = arith.mulf %68, %70 : vector<2x8x32xf32>
    %72 = vector.shape_cast %11 : vector<1x8xf32> to vector<1x8x1xf32>
    %73 = vector.broadcast %72 : vector<1x8x1xf32> to vector<2x8x32xf32>
    %74 = arith.addf %71, %73 : vector<2x8x32xf32>
    %cst_45 = arith.constant 3.000000e+00 : f32
    %75 = vector.broadcast %cst_45 : f32 to vector<2x8x32xf32>
    %76 = arith.addf %74, %75 : vector<2x8x32xf32>
    %cst_46 = arith.constant 0.000000e+00 : f32
    %cst_47 = arith.constant 6.000000e+00 : f32
    %77 = vector.broadcast %cst_46 : f32 to vector<2x8x32xf32>
    %78 = arith.maximumf %77, %76 : vector<2x8x32xf32>
    %79 = vector.broadcast %cst_47 : f32 to vector<2x8x32xf32>
    %80 = arith.minimumf %79, %78 : vector<2x8x32xf32>
    %81 = arith.mulf %74, %80 : vector<2x8x32xf32>
    %cst_48 = arith.constant 0.166666672 : f32
    %82 = vector.broadcast %cst_48 : f32 to vector<2x8x32xf32>
    %83 = arith.mulf %81, %82 : vector<2x8x32xf32>
    %84 = vector.extract_strided_slice %83 {offsets = [0, 0, 0], sizes = [2, 8, 16], strides = [1, 1, 1]} : vector<2x8x32xf32> to vector<2x8x16xf32>
    "tpu.trace_start"() <{level = 10 : i32, message = "nml,om->nol"}> : () -> ()
    %cst_49 = arith.constant dense<0.000000e+00> : vector<32x2x16xf32>
    %85 = tpu.matmul %12, %84, %cst_49 {dimension_numbers = #tpu.dot_dimension_numbers<[1], [1], [0], [0, 2], [0, 0, 1, 0, 1, 2], [], []>} : vector<32x8xf32>, vector<2x8x16xf32>, vector<32x2x16xf32> -> vector<32x2x16xf32>
    %86 = tpu.transpose %85, [1, 0, 2] : vector<32x2x16xf32> -> vector<2x32x16xf32>
    "tpu.trace_stop"() : () -> ()
    %87 = vector.shape_cast %13 : vector<1x32xf32> to vector<1x32x1xf32>
    %88 = vector.broadcast %87 : vector<1x32x1xf32> to vector<2x32x16xf32>
    %89 = arith.addf %86, %88 : vector<2x32x16xf32>
    %90 = arith.negf %89 : vector<2x32x16xf32>
    %91 = math.exp %90 : vector<2x32x16xf32>
    %cst_50 = arith.constant 1.000000e+00 : f32
    %92 = vector.broadcast %cst_50 : f32 to vector<2x32x16xf32>
    %93 = arith.addf %92, %91 : vector<2x32x16xf32>
    %94 = arith.divf %92, %93 : vector<2x32x16xf32>
    %95 = vector.extract_strided_slice %83 {offsets = [0, 0, 16], sizes = [2, 8, 16], strides = [1, 1, 1]} : vector<2x8x32xf32> to vector<2x8x16xf32>
    "tpu.trace_start"() <{level = 10 : i32, message = "nml,om->nol"}> : () -> ()
    %cst_51 = arith.constant dense<0.000000e+00> : vector<32x2x16xf32>
    %96 = tpu.matmul %14, %95, %cst_51 {dimension_numbers = #tpu.dot_dimension_numbers<[1], [1], [0], [0, 2], [0, 0, 1, 0, 1, 2], [], []>} : vector<32x8xf32>, vector<2x8x16xf32>, vector<32x2x16xf32> -> vector<32x2x16xf32>
    %97 = tpu.transpose %96, [1, 0, 2] : vector<32x2x16xf32> -> vector<2x32x16xf32>
    "tpu.trace_stop"() : () -> ()
    %98 = vector.shape_cast %15 : vector<1x32xf32> to vector<1x32x1xf32>
    %99 = vector.broadcast %98 : vector<1x32x1xf32> to vector<2x32x16xf32>
    %100 = arith.addf %97, %99 : vector<2x32x16xf32>
    %101 = arith.negf %100 : vector<2x32x16xf32>
    %102 = math.exp %101 : vector<2x32x16xf32>
    %cst_52 = arith.constant 1.000000e+00 : f32
    %103 = vector.broadcast %cst_52 : f32 to vector<2x32x16xf32>
    %104 = arith.addf %103, %102 : vector<2x32x16xf32>
    %105 = arith.divf %103, %104 : vector<2x32x16xf32>
    %c0_53 = arith.constant 0 : index
    %c0_54 = arith.constant 0 : index
    %106 = vector.load %arg2[%c0_53, %c0_54] : memref<32x256xf32, #tpu.memory_space<vmem>>, vector<16x256xf32>
    "tpu.trace_start"() <{level = 10 : i32, message = "nch,hl->ncl"}> : () -> ()
    %cst_55 = arith.constant dense<0.000000e+00> : vector<2x32x256xf32>
    %107 = tpu.matmul %94, %106, %cst_55 {dimension_numbers = #tpu.dot_dimension_numbers<[2], [0], [0, 1], [1], [0, 0, 0, 1, 1, 1], [], []>} : vector<2x32x16xf32>, vector<16x256xf32>, vector<2x32x256xf32> -> vector<2x32x256xf32>
    "tpu.trace_stop"() : () -> ()
    %c16 = arith.constant 16 : index
    %c0_56 = arith.constant 0 : index
    %108 = vector.load %arg2[%c16, %c0_56] : memref<32x256xf32, #tpu.memory_space<vmem>>, vector<16x256xf32>
    "tpu.trace_start"() <{level = 10 : i32, message = "ncw,wl->ncl"}> : () -> ()
    %cst_57 = arith.constant dense<0.000000e+00> : vector<2x32x256xf32>
    %109 = tpu.matmul %105, %108, %cst_57 {dimension_numbers = #tpu.dot_dimension_numbers<[2], [0], [0, 1], [1], [0, 0, 0, 1, 1, 1], [], []>} : vector<2x32x16xf32>, vector<16x256xf32>, vector<2x32x256xf32> -> vector<2x32x256xf32>
    "tpu.trace_stop"() : () -> ()
    %110 = arith.mulf %0, %107 : vector<2x32x256xf32>
    %111 = arith.mulf %110, %109 : vector<2x32x256xf32>
    %c0_58 = arith.constant 0 : index
    %c0_59 = arith.constant 0 : index
    %c0_60 = arith.constant 0 : index
    %112 = vector.load %arg15[%c0_58, %c0_59, %c0_60] : memref<2x32x256xf32, #tpu.memory_space<vmem>>, vector<2x32x256xf32>
    tpu.vector_store %arg15[%c0_58, %c0_59, %c0_60], %111 {strides = array<i32>} : memref<2x32x256xf32, #tpu.memory_space<vmem>>, vector<2x32x256xf32>,
    return
  }
}

</mosaic_0001>

<llo_original>
// kernel: coord_att.1
$region0: #{coord_att.1}
  #allocation0 [shape = 'u32[]', space=smem, size = 0x4, offset = 0x4, fixed_abs, tag = 'smem constant byte address 0x4 - core index']
  #allocation1 [shape = 'u32[144,128]{1,0:T(1,128)}', space=vmem, size = 0x12000, scoped, tag = 'internal scratch']
  %s0 = inlined_call_operand.vmem [shape: f32[2,32,256], index: 0, kind: input, shape index: {}]
  %s1 = inlined_call_operand.vmem [shape: f32[256,32], index: 1, kind: input, shape index: {}]
  %s2 = inlined_call_operand.vmem [shape: f32[32,256], index: 2, kind: input, shape index: {}]
  %s3 = inlined_call_operand.vmem [shape: f32[32,2], index: 3, kind: input, shape index: {}]
  %s4 = inlined_call_operand.vmem [shape: f32[1,2], index: 4, kind: input, shape index: {}]
  %s5 = inlined_call_operand.vmem [shape: f32[2,32], index: 5, kind: input, shape index: {}]
  %s6 = inlined_call_operand.vmem [shape: f32[1,32], index: 6, kind: input, shape index: {}]
  %s7 = inlined_call_operand.vmem [shape: f32[8,32], index: 7, kind: input, shape index: {}]
  %s8 = inlined_call_operand.vmem [shape: f32[1,8], index: 8, kind: input, shape index: {}]
  %s9 = inlined_call_operand.vmem [shape: f32[1,8], index: 9, kind: input, shape index: {}]
  %s10 = inlined_call_operand.vmem [shape: f32[1,8], index: 10, kind: input, shape index: {}]
  %s11 = inlined_call_operand.vmem [shape: f32[32,8], index: 11, kind: input, shape index: {}]
  %s12 = inlined_call_operand.vmem [shape: f32[1,32], index: 12, kind: input, shape index: {}]
  %s13 = inlined_call_operand.vmem [shape: f32[32,8], index: 13, kind: input, shape index: {}]
  %s14 = inlined_call_operand.vmem [shape: f32[1,32], index: 14, kind: input, shape index: {}]
  %s15 = inlined_call_operand.vmem [shape: f32[2,32,256], index: 15, kind: output, shape index: {}]
  %s16 = sld [smem:[#allocation0]]
  $region70: #{coord_att.1} parent=0
    _
  %s18 = ssub.s32 1, %s16
  %s19 = scalar_select 0, %s18, %s16
  // Predicated region
  $region2: #{coord_att.1} parent=0 // pred_check
    _
  $region3: #{coord_att.1} parent=0 // pred_check_branch
    %21 = sbr.rel (0) target = $region5
  $region4: #{coord_att.1} parent=0 // pred_region
    _
  $region5: #{coord_att.1} parent=0 // pred_fallthru
    _
  // Predicated region
  $region6: #{coord_att.1} parent=0 // pred_check
    _
  $region7: #{coord_att.1} parent=0 // pred_check_branch
    %23 = sbr.rel (0) target = $region9
  $region8: #{coord_att.1} parent=0 // pred_region
    _
  $region9: #{coord_att.1} parent=0 // pred_fallthru
    _
  // Predicated region
  $region10: #{coord_att.1} parent=0 // pred_check
    _
  $region11: #{coord_att.1} parent=0 // pred_check_branch
    %25 = sbr.rel (0) target = $region13
  $region12: #{coord_att.1} parent=0 // pred_region
    _
  $region13: #{coord_att.1} parent=0 // pred_fallthru
    _
  // Predicated region
  $region14: #{coord_att.1} parent=0 // pred_check
    _
  $region15: #{coord_att.1} parent=0 // pred_check_branch
    %27 = sbr.rel (0) target = $region17
  $region16: #{coord_att.1} parent=0 // pred_region
    _
  $region17: #{coord_att.1} parent=0 // pred_fallthru
    _
  // Predicated region
  $region18: #{coord_att.1} parent=0 // pred_check
    _
  $region19: #{coord_att.1} parent=0 // pred_check_branch
    %29 = sbr.rel (0) target = $region21
  $region20: #{coord_att.1} parent=0 // pred_region
    _
  $region21: #{coord_att.1} parent=0 // pred_fallthru
    _
  // Predicated region
  $region22: #{coord_att.1} parent=0 // pred_check
    _
  $region23: #{coord_att.1} parent=0 // pred_check_branch
    %31 = sbr.rel (0) target = $region25
  $region24: #{coord_att.1} parent=0 // pred_region
    _
  $region25: #{coord_att.1} parent=0 // pred_fallthru
    _
  // Predicated region
  $region26: #{coord_att.1} parent=0 // pred_check
    _
  $region27: #{coord_att.1} parent=0 // pred_check_branch
    %33 = sbr.rel (0) target = $region29
  $region28: #{coord_att.1} parent=0 // pred_region
    _
  $region29: #{coord_att.1} parent=0 // pred_fallthru
    _
  // Predicated region
  $region30: #{coord_att.1} parent=0 // pred_check
    _
  $region31: #{coord_att.1} parent=0 // pred_check_branch
    %35 = sbr.rel (0) target = $region33
  $region32: #{coord_att.1} parent=0 // pred_region
    _
  $region33: #{coord_att.1} parent=0 // pred_fallthru
    _
  // Predicated region
  $region34: #{coord_att.1} parent=0 // pred_check
    _
  $region35: #{coord_att.1} parent=0 // pred_check_branch
    %37 = sbr.rel (0) target = $region37
  $region36: #{coord_att.1} parent=0 // pred_region
    _
  $region37: #{coord_att.1} parent=0 // pred_fallthru
    _
  // Predicated region
  $region38: #{coord_att.1} parent=0 // pred_check
    _
  $region39: #{coord_att.1} parent=0 // pred_check_branch
    %39 = sbr.rel (0) target = $region41
  $region40: #{coord_att.1} parent=0 // pred_region
    _
  $region41: #{coord_att.1} parent=0 // pred_fallthru
    _
  // Predicated region
  $region42: #{coord_att.1} parent=0 // pred_check
    _
  $region43: #{coord_att.1} parent=0 // pred_check_branch
    %41 = sbr.rel (0) target = $region45
  $region44: #{coord_att.1} parent=0 // pred_region
    _
  $region45: #{coord_att.1} parent=0 // pred_fallthru
    _
  // Predicated region
  $region46: #{coord_att.1} parent=0 // pred_check
    _
  $region47: #{coord_att.1} parent=0 // pred_check_branch
    %43 = sbr.rel (0) target = $region49
  $region48: #{coord_att.1} parent=0 // pred_region
    _
  $region49: #{coord_att.1} parent=0 // pred_fallthru
    _
  // Predicated region
  $region50: #{coord_att.1} parent=0 // pred_check
    _
  $region51: #{coord_att.1} parent=0 // pred_check_branch
    %45 = sbr.rel (0) target = $region53
  $region52: #{coord_att.1} parent=0 // pred_region
    _
  $region53: #{coord_att.1} parent=0 // pred_fallthru
    _
  // Predicated region
  $region54: #{coord_att.1} parent=0 // pred_check
    _
  $region55: #{coord_att.1} parent=0 // pred_check_branch
    %47 = sbr.rel (0) target = $region57
  $region56: #{coord_att.1} parent=0 // pred_region
    _
  $region57: #{coord_att.1} parent=0 // pred_fallthru
    _
  // Predicated region
  $region58: #{coord_att.1} parent=0 // pred_check
    _
  $region59: #{coord_att.1} parent=0 // pred_check_branch
    %49 = sbr.rel (0) target = $region61
  $region60: #{coord_att.1} parent=0 // pred_region
    _
  $region61: #{coord_att.1} parent=0 // pred_fallthru
    _
  %v50 = vld [vmem:[%s0] sm:$0xff]
  %v51 = vld [vmem:[%s0 + $0x8] sm:$0xff]
  %v52 = vld [vmem:[%s0 + $0x10] sm:$0xff]
  %v53 = vld [vmem:[%s0 + $0x18] sm:$0xff]
  %v54 = vld [vmem:[%s0 + $0x20] sm:$0xff]
  %v55 = vld [vmem:[%s0 + $0x28] sm:$0xff]
  %v56 = vld [vmem:[%s0 + $0x30] sm:$0xff]
  %v57 = vld [vmem:[%s0 + $0x38] sm:$0xff]
  %v58 = vld [vmem:[%s0 + $0x40] sm:$0xff]
  %v59 = vld [vmem:[%s0 + $0x48] sm:$0xff]
  %v60 = vld [vmem:[%s0 + $0x50] sm:$0xff]
  %v61 = vld [vmem:[%s0 + $0x58] sm:$0xff]
  %v62 = vld [vmem:[%s0 + $0x60] sm:$0xff]
  %v63 = vld [vmem:[%s0 + $0x68] sm:$0xff]
  %v64 = vld [vmem:[%s0 + $0x70] sm:$0xff]
  %v65 = vld [vmem:[%s0 + $0x78] sm:$0xff]
  %v66 = vld [vmem:[%s1] sm:$0xff]
  %v67 = vld [vmem:[%s1 + $0x8] sm:$0xff]
  %v68 = vld [vmem:[%s1 + $0x10] sm:$0xff]
  %v69 = vld [vmem:[%s1 + $0x18] sm:$0xff]
  %v70 = vld [vmem:[%s1 + $0x20] sm:$0xff]
  %v71 = vld [vmem:[%s1 + $0x28] sm:$0xff]
  %v72 = vld [vmem:[%s1 + $0x30] sm:$0xff]
  %v73 = vld [vmem:[%s1 + $0x38] sm:$0xff]
  %v74 = vld [vmem:[%s1 + $0x40] sm:$0xff]
  %v75 = vld [vmem:[%s1 + $0x48] sm:$0xff]
  %v76 = vld [vmem:[%s1 + $0x50] sm:$0xff]
  %v77 = vld [vmem:[%s1 + $0x58] sm:$0xff]
  %v78 = vld [vmem:[%s1 + $0x60] sm:$0xff]
  %v79 = vld [vmem:[%s1 + $0x68] sm:$0xff]
  %v80 = vld [vmem:[%s1 + $0x70] sm:$0xff]
  %v81 = vld [vmem:[%s1 + $0x78] sm:$0xff]
  %v82 = vld [vmem:[%s1 + $0x80] sm:$0xff]
  %v83 = vld [vmem:[%s1 + $0x88] sm:$0xff]
  %v84 = vld [vmem:[%s1 + $0x90] sm:$0xff]
  %v85 = vld [vmem:[%s1 + $0x98] sm:$0xff]
  %v86 = vld [vmem:[%s1 + $0xa0] sm:$0xff]
  %v87 = vld [vmem:[%s1 + $0xa8] sm:$0xff]
  %v88 = vld [vmem:[%s1 + $0xb0] sm:$0xff]
  %v89 = vld [vmem:[%s1 + $0xb8] sm:$0xff]
  %v90 = vld [vmem:[%s1 + $0xc0] sm:$0xff]
  %v91 = vld [vmem:[%s1 + $0xc8] sm:$0xff]
  %v92 = vld [vmem:[%s1 + $0xd0] sm:$0xff]
  %v93 = vld [vmem:[%s1 + $0xd8] sm:$0xff]
  %v94 = vld [vmem:[%s1 + $0xe0] sm:$0xff]
  %v95 = vld [vmem:[%s1 + $0xe8] sm:$0xff]
  %v96 = vld [vmem:[%s1 + $0xf0] sm:$0xff]
  %v97 = vld [vmem:[%s1 + $0xf8] sm:$0xff]
  %98 = vmatprep.subr.mxu0 0.0
  %99 = vmatpush1.msra.mxu0 %v81
  %100 = vmatprep.subr.mxu0 0.0
  %101 = vmatpush1.msra.mxu0 %v80
  %102 = vmatprep.subr.mxu0 0.0
  %103 = vmatpush1.msra.mxu0 %v79
  %104 = vmatprep.subr.mxu0 0.0
  %105 = vmatpush1.msra.mxu0 %v78
  %106 = vmatprep.subr.mxu0 0.0
  %107 = vmatpush1.msra.mxu0 %v77
  %108 = vmatprep.subr.mxu0 0.0
  %109 = vmatpush1.msra.mxu0 %v76
  %110 = vmatprep.subr.mxu0 0.0
  %111 = vmatpush1.msra.mxu0 %v75
  %112 = vmatprep.subr.mxu0 0.0
  %113 = vmatpush1.msra.mxu0 %v74
  %114 = vmatprep.subr.mxu0 0.0
  %115 = vmatpush1.msra.mxu0 %v73
  %116 = vmatprep.subr.mxu0 0.0
  %117 = vmatpush1.msra.mxu0 %v72
  %118 = vmatprep.subr.mxu0 0.0
  %119 = vmatpush1.msra.mxu0 %v71
  %120 = vmatprep.subr.mxu0 0.0
  %121 = vmatpush1.msra.mxu0 %v70
  %122 = vmatprep.subr.mxu0 0.0
  %123 = vmatpush1.msra.mxu0 %v69
  %124 = vmatprep.subr.mxu0 0.0
  %125 = vmatpush1.msra.mxu0 %v68
  %126 = vmatprep.subr.mxu0 0.0
  %127 = vmatpush1.msra.mxu0 %v67
  %128 = vmatprep.subr.mxu0 0.0
  %129 = vmatpush1.msra.mxu0 %v66
  %130 = vmatprep.subr.mxu0 0.0
  %131 = vmatpush2.msra.mxu0 %v97
  %132 = vmatprep.subr.mxu0 0.0
  %133 = vmatpush2.msra.mxu0 %v96
  %134 = vmatprep.subr.mxu0 0.0
  %135 = vmatpush2.msra.mxu0 %v95
  %136 = vmatprep.subr.mxu0 0.0
  %137 = vmatpush2.msra.mxu0 %v94
  %138 = vmatprep.subr.mxu0 0.0
  %139 = vmatpush2.msra.mxu0 %v93
  %140 = vmatprep.subr.mxu0 0.0
  %141 = vmatpush2.msra.mxu0 %v92
  %142 = vmatprep.subr.mxu0 0.0
  %143 = vmatpush2.msra.mxu0 %v91
  %144 = vmatprep.subr.mxu0 0.0
  %145 = vmatpush2.msra.mxu0 %v90
  %146 = vmatprep.subr.mxu0 0.0
  %147 = vmatpush2.msra.mxu0 %v89
  %148 = vmatprep.subr.mxu0 0.0
  %149 = vmatpush2.msra.mxu0 %v88
  %150 = vmatprep.subr.mxu0 0.0
  %151 = vmatpush2.msra.mxu0 %v87
  %152 = vmatprep.subr.mxu0 0.0
  %153 = vmatpush2.msra.mxu0 %v86
  %154 = vmatprep.subr.mxu0 0.0
  %155 = vmatpush2.msra.mxu0 %v85
  %156 = vmatprep.subr.mxu0 0.0
  %157 = vmatpush2.msra.mxu0 %v84
  %158 = vmatprep.subr.mxu0 0.0
  %159 = vmatpush2.msra.mxu0 %v83
  %160 = vmatprep.subr.mxu0 0.0
  %161 = vmatpush2.msra.mxu0 %v82
  %162 = vmatprep.mubr.f32.mxu0 %v51
  %163 = vmatmul.mubr.f32.gmra.mxu0 %v50
  %v164 = vpop.f32.mrf.mxu0
  %v165 = vadd.f32 0.0, %v164
  %v166 = vpop.f32.mrf.mxu0
  %167 = vmatprep.mubr.f32.mxu0 %v53
  %168 = vmatmul.mubr.f32.gmra.mxu0 %v52
  %v169 = vpop.f32.mrf.mxu0
  %v170 = vadd.f32 0.0, %v169
  %v171 = vpop.f32.mrf.mxu0
  %172 = vmatprep.mubr.f32.mxu0 %v55
  %173 = vmatmul.mubr.f32.gmra.mxu0 %v54
  %v174 = vpop.f32.mrf.mxu0
  %v175 = vadd.f32 0.0, %v174
  %v176 = vpop.f32.mrf.mxu0
  %177 = vmatprep.mubr.f32.mxu0 %v57
  %178 = vmatmul.mubr.f32.gmra.mxu0 %v56
  %v179 = vpop.f32.mrf.mxu0
  %v180 = vadd.f32 0.0, %v179
  %v181 = vpop.f32.mrf.mxu0
  %182 = vmatprep.mubr.f32.mxu0 %v59
  %183 = vmatmul.mubr.f32.gmra.mxu0 %v58
  %v184 = vpop.f32.mrf.mxu0
  %v185 = vadd.f32 0.0, %v184
  %v186 = vpop.f32.mrf.mxu0
  %187 = vmatprep.mubr.f32.mxu0 %v61
  %188 = vmatmul.mubr.f32.gmra.mxu0 %v60
  %v189 = vpop.f32.mrf.mxu0
  %v190 = vadd.f32 0.0, %v189
  %v191 = vpop.f32.mrf.mxu0
  %192 = vmatprep.mubr.f32.mxu0 %v63
  %193 = vmatmul.mubr.f32.gmra.mxu0 %v62
  %v194 = vpop.f32.mrf.mxu0
  %v195 = vadd.f32 0.0, %v194
  %v196 = vpop.f32.mrf.mxu0
  %197 = vmatprep.mubr.f32.mxu0 %v65
  %198 = vmatmul.mubr.f32.gmra.mxu0 %v64
  %v199 = vpop.f32.mrf.mxu0
  %v200 = vadd.f32 0.0, %v199
  %v201 = vpop.f32.mrf.mxu0
  %202 = vdwg.mxu0
  %v203 = vmax.f32 %v50, %v51
  %204 = vmax.xlane.f32.xlu0 %v203
  %v205 = vpop.xlane.xlu0 %204
  %v206 = vmax.f32 %v52, %v53
  %207 = vmax.xlane.f32.xlu0 %v206
  %v208 = vpop.xlane.xlu0 %207
  %v209 = vmax.f32 %v54, %v55
  %210 = vmax.xlane.f32.xlu0 %v209
  %v211 = vpop.xlane.xlu0 %210
  %v212 = vmax.f32 %v56, %v57
  %213 = vmax.xlane.f32.xlu0 %v212
  %v214 = vpop.xlane.xlu0 %213
  %v215 = vmax.f32 %v58, %v59
  %216 = vmax.xlane.f32.xlu0 %v215
  %v217 = vpop.xlane.xlu0 %216
  %v218 = vmax.f32 %v60, %v61
  %219 = vmax.xlane.f32.xlu0 %v218
  %v220 = vpop.xlane.xlu0 %219
  %v221 = vmax.f32 %v62, %v63
  %222 = vmax.xlane.f32.xlu0 %v221
  %v223 = vpop.xlane.xlu0 %222
  %v224 = vmax.f32 %v64, %v65
  %225 = vmax.xlane.f32.xlu0 %v224
  %v226 = vpop.xlane.xlu0 %225
  %v227 = vld [vmem:[%s3] sm:$0xff]
  %v228 = vld [vmem:[%s3 + $0x8] sm:$0xff]
  %v229 = vld [vmem:[%s3 + $0x10] sm:$0xff]
  %v230 = vld [vmem:[%s3 + $0x18] sm:$0xff]
  %v231 = vld [vmem:[%s4] sm:$0x1]
  %v232 = vld [vmem:[%s5] sm:$0x3]
  %v233 = vld [vmem:[%s6] sm:$0x1]
  %v234 = vld [vmem:[%s7] sm:$0xff]
  %v235 = vld [vmem:[%s8] sm:$0x1]
  %v236 = vld [vmem:[%s9] sm:$0x1]
  %v237 = vld [vmem:[%s10] sm:$0x1]
  %v238 = vld [vmem:[%s11] sm:$0xff]
  %v239 = vld [vmem:[%s11 + $0x8] sm:$0xff]
  %v240 = vld [vmem:[%s11 + $0x10] sm:$0xff]
  %v241 = vld [vmem:[%s11 + $0x18] sm:$0xff]
  %v242 = vld [vmem:[%s12] sm:$0x1]
  %v243 = vld [vmem:[%s13] sm:$0xff]
  %v244 = vld [vmem:[%s13 + $0x8] sm:$0xff]
  %v245 = vld [vmem:[%s13 + $0x10] sm:$0xff]
  %v246 = vld [vmem:[%s13 + $0x18] sm:$0xff]
  %v247 = vld [vmem:[%s14] sm:$0x1]
  %vm248 = vcmask 130048
  %v249 = vsel %vm248, %v165, 0.0
  %250 = vadd.xlane.f32.xlu0 %v249
  %v251 = vpop.xlane.xlu0 %250
  %v252 = vsel %vm248, %v170, 0.0
  %253 = vadd.xlane.f32.xlu0 %v252
  %v254 = vpop.xlane.xlu0 %253
  %v255 = vsel %vm248, %v175, 0.0
  %256 = vadd.xlane.f32.xlu0 %v255
  %v257 = vpop.xlane.xlu0 %256
  %v258 = vsel %vm248, %v180, 0.0
  %259 = vadd.xlane.f32.xlu0 %v258
  %v260 = vpop.xlane.xlu0 %259
  %v261 = vsel %vm248, %v185, 0.0
  %262 = vadd.xlane.f32.xlu0 %v261
  %v263 = vpop.xlane.xlu0 %262
  %v264 = vsel %vm248, %v190, 0.0
  %265 = vadd.xlane.f32.xlu0 %v264
  %v266 = vpop.xlane.xlu0 %265
  %v267 = vsel %vm248, %v195, 0.0
  %268 = vadd.xlane.f32.xlu0 %v267
  %v269 = vpop.xlane.xlu0 %268
  %v270 = vsel %vm248, %v200, 0.0
  %271 = vadd.xlane.f32.xlu0 %v270
  %v272 = vpop.xlane.xlu0 %271
  %v273 = vrcp.pop 16.0
  %v274 = vmul.f32 %v251, %v273
  %v275 = vmul.f32 %v254, %v273
  %v276 = vmul.f32 %v257, %v273
  %v277 = vmul.f32 %v260, %v273
  %v278 = vmul.f32 %v263, %v273
  %v279 = vmul.f32 %v266, %v273
  %v280 = vmul.f32 %v269, %v273
  %v281 = vmul.f32 %v272, %v273
  %v290 = vlaneseq
  %v291 = vand.u32 %v290, 127
  %v292 = vlaneseq
  %v293 = vshrl.u32 %v292, 7
  %v294 = vsub.s32 %v291, %v293
  %v295 = vrot.slane %v274, %v294
  %v296 = vadd.s32 %v291, 4294967288
  %v297 = vlaneseq
  %v298 = vshrl.u32 %v297, 7
  %v299 = vsub.s32 %v296, %v298
  %v300 = vrot.slane %v275, %v299
  %vm301 = vcmask 130112
  %v302 = vsel %vm301, %v300, %v295
  %v303 = vadd.s32 %v291, 4294967280
  %v304 = vlaneseq
  %v305 = vshrl.u32 %v304, 7
  %v306 = vsub.s32 %v303, %v305
  %v307 = vrot.slane %v276, %v306
  %vm308 = vcmask 195712
  %v309 = vsel %vm308, %v307, %v302
  %v310 = vadd.s32 %v291, 4294967272
  %v311 = vlaneseq
  %v312 = vshrl.u32 %v311, 7
  %v313 = vsub.s32 %v310, %v312
  %v314 = vrot.slane %v277, %v313
  %vm315 = vcmask 261312
  %v316 = vsel %vm315, %v314, %v309
  %v317 = vlaneseq
  %v318 = vshrl.u32 %v317, 7
  %v319 = vsub.s32 %v291, %v318
  %v320 = vrot.slane %v278, %v319
  %v321 = vlaneseq
  %v322 = vshrl.u32 %v321, 7
  %v323 = vsub.s32 %v296, %v322
  %v324 = vrot.slane %v279, %v323
  %v325 = vsel %vm301, %v324, %v320
  %v326 = vlaneseq
  %v327 = vshrl.u32 %v326, 7
  %v328 = vsub.s32 %v303, %v327
  %v329 = vrot.slane %v280, %v328
  %v330 = vsel %vm308, %v329, %v325
  %v331 = vlaneseq
  %v332 = vshrl.u32 %v331, 7
  %v333 = vsub.s32 %v310, %v332
  %v334 = vrot.slane %v281, %v333
  %v335 = vsel %vm315, %v334, %v330
  %vm336 = vcmask 1041409
  %v337 = vsel %vm336, %v335, %v316
  %v347 = vlaneseq
  %v348 = vshrl.u32 %v347, 7
  %v349 = vsub.s32 %v291, %v348
  %v350 = vrot.slane %v205, %v349
  %v351 = vlaneseq
  %v352 = vshrl.u32 %v351, 7
  %v353 = vsub.s32 %v296, %v352
  %v354 = vrot.slane %v208, %v353
  %v355 = vsel %vm301, %v354, %v350
  %v356 = vlaneseq
  %v357 = vshrl.u32 %v356, 7
  %v358 = vsub.s32 %v303, %v357
  %v359 = vrot.slane %v211, %v358
  %v360 = vsel %vm308, %v359, %v355
  %v361 = vlaneseq
  %v362 = vshrl.u32 %v361, 7
  %v363 = vsub.s32 %v310, %v362
  %v364 = vrot.slane %v214, %v363
  %v365 = vsel %vm315, %v364, %v360
  %v366 = vlaneseq
  %v367 = vshrl.u32 %v366, 7
  %v368 = vsub.s32 %v291, %v367
  %v369 = vrot.slane %v217, %v368
  %v370 = vlaneseq
  %v371 = vshrl.u32 %v370, 7
  %v372 = vsub.s32 %v296, %v371
  %v373 = vrot.slane %v220, %v372
  %v374 = vsel %vm301, %v373, %v369
  %v375 = vlaneseq
  %v376 = vshrl.u32 %v375, 7
  %v377 = vsub.s32 %v303, %v376
  %v378 = vrot.slane %v223, %v377
  %v379 = vsel %vm308, %v378, %v374
  %v380 = vlaneseq
  %v381 = vshrl.u32 %v380, 7
  %v382 = vsub.s32 %v310, %v381
  %v383 = vrot.slane %v226, %v382
  %v384 = vsel %vm315, %v383, %v379
  %vm385 = vcmask 1043459
  %v386 = vsel %vm385, %v384, %v365
  %vm388 = vcmask 1041408
  %v389 = vsel %vm388, %v337, %v386
  %v391 = vlaneseq
  %v392 = vshrl.u32 %v391, 7
  %v393 = vsub.s32 0, %v392
  %v394 = vrot.slane %v231, %v393
  %vm396 = vcmask 261120
  %v398 = vsel %vm396, %v389, 0
  %400 = vmatprep.subr.mxu0 0.0
  %401 = vmatpush1.msra.mxu0 0.0
  %402 = vmatprep.subr.mxu0 0.0
  %403 = vmatpush1.msra.mxu0 0.0
  %404 = vmatprep.subr.mxu0 0.0
  %405 = vmatpush1.msra.mxu0 0.0
  %406 = vmatprep.subr.mxu0 0.0
  %407 = vmatpush1.msra.mxu0 0.0
  %408 = vmatprep.subr.mxu0 0.0
  %409 = vmatpush1.msra.mxu0 0.0
  %410 = vmatprep.subr.mxu0 0.0
  %411 = vmatpush1.msra.mxu0 0.0
  %412 = vmatprep.subr.mxu0 0.0
  %413 = vmatpush1.msra.mxu0 0.0
  %414 = vmatprep.subr.mxu0 0.0
  %415 = vmatpush1.msra.mxu0 0.0
  %416 = vmatprep.subr.mxu0 0.0
  %417 = vmatpush1.msra.mxu0 0.0
  %418 = vmatprep.subr.mxu0 0.0
  %419 = vmatpush1.msra.mxu0 0.0
  %420 = vmatprep.subr.mxu0 0.0
  %421 = vmatpush1.msra.mxu0 0.0
  %422 = vmatprep.subr.mxu0 0.0
  %423 = vmatpush1.msra.mxu0 0.0
  %424 = vmatprep.subr.mxu0 0.0
  %425 = vmatpush1.msra.mxu0 %v230
  %426 = vmatprep.subr.mxu0 0.0
  %427 = vmatpush1.msra.mxu0 %v229
  %428 = vmatprep.subr.mxu0 0.0
  %429 = vmatpush1.msra.mxu0 %v228
  %430 = vmatprep.subr.mxu0 0.0
  %431 = vmatpush1.msra.mxu0 %v227
  %432 = vmatprep.subr.mxu0 0.0
  %433 = vmatpush2.msra.mxu0 0.0
  %434 = vmatprep.subr.mxu0 0.0
  %435 = vmatpush2.msra.mxu0 0.0
  %436 = vmatprep.subr.mxu0 0.0
  %437 = vmatpush2.msra.mxu0 0.0
  %438 = vmatprep.subr.mxu0 0.0
  %439 = vmatpush2.msra.mxu0 0.0
  %440 = vmatprep.subr.mxu0 0.0
  %441 = vmatpush2.msra.mxu0 0.0
  %442 = vmatprep.subr.mxu0 0.0
  %443 = vmatpush2.msra.mxu0 0.0
  %444 = vmatprep.subr.mxu0 0.0
  %445 = vmatpush2.msra.mxu0 0.0
  %446 = vmatprep.subr.mxu0 0.0
  %447 = vmatpush2.msra.mxu0 0.0
  %448 = vmatprep.subr.mxu0 0.0
  %449 = vmatpush2.msra.mxu0 0.0
  %450 = vmatprep.subr.mxu0 0.0
  %451 = vmatpush2.msra.mxu0 0.0
  %452 = vmatprep.subr.mxu0 0.0
  %453 = vmatpush2.msra.mxu0 0.0
  %454 = vmatprep.subr.mxu0 0.0
  %455 = vmatpush2.msra.mxu0 0.0
  %456 = vmatprep.subr.mxu0 0.0
  %457 = vmatpush2.msra.mxu0 0.0
  %458 = vmatprep.subr.mxu0 0.0
  %459 = vmatpush2.msra.mxu0 0.0
  %460 = vmatprep.subr.mxu0 0.0
  %461 = vmatpush2.msra.mxu0 0.0
  %462 = vmatprep.subr.mxu0 0.0
  %463 = vmatpush2.msra.mxu0 0.0
  %464 = vmatprep.mubr.f32.mxu0 0.0
  %465 = vmatmul.mubr.f32.gmra.mxu0 %v398
  %v466 = vpop.f32.mrf.mxu0
  %v467 = vadd.f32 %v394, %v466
  %v468 = vpop.f32.mrf.mxu0
  %469 = vdwg.mxu0
  %v470 = vmax.f32 %v467, 0.0
  %v472 = vlaneseq
  %v473 = vshrl.u32 %v472, 7
  %v474 = vsub.s32 0, %v473
  %v475 = vrot.slane %v233, %v474
  %vm477 = vcmask 15360
  %v479 = vsel %vm477, %v470, 0
  %v482 = vsel %vm388, %v232, 0
  %484 = vmatprep.subr.mxu0 0.0
  %485 = vmatpush1.msra.mxu0 0.0
  %486 = vmatprep.subr.mxu0 0.0
  %487 = vmatpush1.msra.mxu0 0.0
  %488 = vmatprep.subr.mxu0 0.0
  %489 = vmatpush1.msra.mxu0 0.0
  %490 = vmatprep.subr.mxu0 0.0
  %491 = vmatpush1.msra.mxu0 0.0
  %492 = vmatprep.subr.mxu0 0.0
  %493 = vmatpush1.msra.mxu0 0.0
  %494 = vmatprep.subr.mxu0 0.0
  %495 = vmatpush1.msra.mxu0 0.0
  %496 = vmatprep.subr.mxu0 0.0
  %497 = vmatpush1.msra.mxu0 0.0
  %498 = vmatprep.subr.mxu0 0.0
  %499 = vmatpush1.msra.mxu0 0.0
  %500 = vmatprep.subr.mxu0 0.0
  %501 = vmatpush1.msra.mxu0 0.0
  %502 = vmatprep.subr.mxu0 0.0
  %503 = vmatpush1.msra.mxu0 0.0
  %504 = vmatprep.subr.mxu0 0.0
  %505 = vmatpush1.msra.mxu0 0.0
  %506 = vmatprep.subr.mxu0 0.0
  %507 = vmatpush1.msra.mxu0 0.0
  %508 = vmatprep.subr.mxu0 0.0
  %509 = vmatpush1.msra.mxu0 0.0
  %510 = vmatprep.subr.mxu0 0.0
  %511 = vmatpush1.msra.mxu0 0.0
  %512 = vmatprep.subr.mxu0 0.0
  %513 = vmatpush1.msra.mxu0 0.0
  %514 = vmatprep.subr.mxu0 0.0
  %515 = vmatpush1.msra.mxu0 %v482
  %516 = vmatprep.subr.mxu0 0.0
  %517 = vmatpush2.msra.mxu0 0.0
  %518 = vmatprep.subr.mxu0 0.0
  %519 = vmatpush2.msra.mxu0 0.0
  %520 = vmatprep.subr.mxu0 0.0
  %521 = vmatpush2.msra.mxu0 0.0
  %522 = vmatprep.subr.mxu0 0.0
  %523 = vmatpush2.msra.mxu0 0.0
  %524 = vmatprep.subr.mxu0 0.0
  %525 = vmatpush2.msra.mxu0 0.0
  %526 = vmatprep.subr.mxu0 0.0
  %527 = vmatpush2.msra.mxu0 0.0
  %528 = vmatprep.subr.mxu0 0.0
  %529 = vmatpush2.msra.mxu0 0.0
  %530 = vmatprep.subr.mxu0 0.0
  %531 = vmatpush2.msra.mxu0 0.0
  %532 = vmatprep.subr.mxu0 0.0
  %533 = vmatpush2.msra.mxu0 0.0
  %534 = vmatprep.subr.mxu0 0.0
  %535 = vmatpush2.msra.mxu0 0.0
  %536 = vmatprep.subr.mxu0 0.0
  %537 = vmatpush2.msra.mxu0 0.0
  %538 = vmatprep.subr.mxu0 0.0
  %539 = vmatpush2.msra.mxu0 0.0
  %540 = vmatprep.subr.mxu0 0.0
  %541 = vmatpush2.msra.mxu0 0.0
  %542 = vmatprep.subr.mxu0 0.0
  %543 = vmatpush2.msra.mxu0 0.0
  %544 = vmatprep.subr.mxu0 0.0
  %545 = vmatpush2.msra.mxu0 0.0
  %546 = vmatprep.subr.mxu0 0.0
  %547 = vmatpush2.msra.mxu0 0.0
  %548 = vmatprep.mubr.f32.mxu0 0.0
  %549 = vmatmul.mubr.f32.gmra.mxu0 %v479
  %v550 = vpop.f32.mrf.mxu0
  %v551 = vadd.f32 %v475, %v550
  %v552 = vpop.f32.mrf.mxu0
  %553 = vdwg.mxu0
  %v555 = vrot.slane %v551, 2
  %v557 = vadd.f32 %v551, %v555
  %v558 = vxor.u32 %v557, 2147483648
  %v559 = vmul.f32 %v558, 1.442695
  %v560 = vpow.pop %v559
  %v561 = vadd.f32 %v560, 1.0
  %v562 = vrcp.pop %v561
  %v563 = vmul.f32 1.0, %v562
  %v564 = vlaneseq
  %v565 = vshrl.u32 %v564, 7
  %v566 = vsub.s32 0, %v565
  %v567 = vrot.slane %v563, %v566
  %569 = vbcast.lane.b32.xlu0 %v567, 256
  %v570 = vpop.permute.xlu0 %569
  %s572 = sor.u32 256, 8
  %573 = vbcast.lane.b32.xlu0 %v567, %s572
  %v574 = vpop.permute.xlu0 %573
  %s576 = sor.u32 256, 16
  %577 = vbcast.lane.b32.xlu0 %v567, %s576
  %v578 = vpop.permute.xlu0 %577
  %s580 = sor.u32 256, 24
  %581 = vbcast.lane.b32.xlu0 %v567, %s580
  %v582 = vpop.permute.xlu0 %581
  %v583 = vlaneseq
  %v584 = vshrl.u32 %v583, 7
  %v585 = vsub.s32 1, %v584
  %v586 = vrot.slane %v563, %v585
  %588 = vbcast.lane.b32.xlu0 %v586, 256
  %v589 = vpop.permute.xlu0 %588
  %s591 = sor.u32 256, 8
  %592 = vbcast.lane.b32.xlu0 %v586, %s591
  %v593 = vpop.permute.xlu0 %592
  %s595 = sor.u32 256, 16
  %596 = vbcast.lane.b32.xlu0 %v586, %s595
  %v597 = vpop.permute.xlu0 %596
  %s599 = sor.u32 256, 24
  %600 = vbcast.lane.b32.xlu0 %v586, %s599
  %v601 = vpop.permute.xlu0 %600
  %v602 = vmul.f32 %v165, %v570
  %v603 = vmul.f32 %v170, %v574
  %v604 = vmul.f32 %v175, %v578
  %v605 = vmul.f32 %v180, %v582
  %v606 = vmul.f32 %v185, %v589
  %v607 = vmul.f32 %v190, %v593
  %v608 = vmul.f32 %v195, %v597
  %v609 = vmul.f32 %v200, %v601
  %v610 = vcombine.high %v602, 0.0
  %v612 = vunpack.c.l.s4 1983009808
  %v613 = vunpack.c.0.s8 %v612
  %v614 = vlaneseq
  %v615 = vshrl.u32 %v614, 7
  %v616 = vsub.s32 %v613, %v615
  %v617 = vrot.slane %v602, %v616
  %v619 = vunpack.c.l.s4 1983009808
  %v620 = vunpack.c.0.s8 %v619
  %v621 = vlaneseq
  %v622 = vshrl.u32 %v621, 7
  %v623 = vsub.s32 %v620, %v622
  %v624 = vrot.slane %v610, %v623
  %v625 = vcombine.high %v606, 0.0
  %v627 = vunpack.c.l.s4 1983009808
  %v628 = vunpack.c.0.s8 %v627
  %v629 = vlaneseq
  %v630 = vshrl.u32 %v629, 7
  %v631 = vsub.s32 %v628, %v630
  %v632 = vrot.slane %v606, %v631
  %v634 = vunpack.c.l.s4 1983009808
  %v635 = vunpack.c.0.s8 %v634
  %v636 = vlaneseq
  %v637 = vshrl.u32 %v636, 7
  %v638 = vsub.s32 %v635, %v637
  %v639 = vrot.slane %v625, %v638
  %v640 = vcombine.low %v617, %v632
  %v641 = vcombine.high %v617, %v632
  %v643 = vunpack.c.l.s4 1934713408
  %v644 = vunpack.c.0.s8 %v643
  %v645 = vlaneseq
  %v646 = vshrl.u32 %v645, 7
  %v647 = vsub.s32 %v644, %v646
  %v648 = vrot.slane %v640, %v647
  %v650 = vunpack.c.l.s4 1934713408
  %v651 = vunpack.c.0.s8 %v650
  %v652 = vlaneseq
  %v653 = vshrl.u32 %v652, 7
  %v654 = vsub.s32 %v651, %v653
  %v655 = vrot.slane %v641, %v654
  %v656 = vcombine.low %v624, %v639
  %v657 = vcombine.high %v624, %v639
  %v659 = vunpack.c.l.s4 1934713408
  %v660 = vunpack.c.0.s8 %v659
  %v661 = vlaneseq
  %v662 = vshrl.u32 %v661, 7
  %v663 = vsub.s32 %v660, %v662
  %v664 = vrot.slane %v656, %v663
  %v666 = vunpack.c.l.s4 1934713408
  %v667 = vunpack.c.0.s8 %v666
  %v668 = vlaneseq
  %v669 = vshrl.u32 %v668, 7
  %v670 = vsub.s32 %v667, %v669
  %v671 = vrot.slane %v657, %v670
  %v672 = vcombine.high %v648, 0.0
  %v673 = vcombine.high %v655, 0.0
  %v674 = vcombine.high %v664, 0.0
  %v675 = vcombine.high %v671, 0.0
  %v676 = vcombine.high %v603, 0.0
  %v678 = vunpack.c.l.s4 1983009808
  %v679 = vunpack.c.0.s8 %v678
  %v680 = vlaneseq
  %v681 = vshrl.u32 %v680, 7
  %v682 = vsub.s32 %v679, %v681
  %v683 = vrot.slane %v603, %v682
  %v685 = vunpack.c.l.s4 1983009808
  %v686 = vunpack.c.0.s8 %v685
  %v687 = vlaneseq
  %v688 = vshrl.u32 %v687, 7
  %v689 = vsub.s32 %v686, %v688
  %v690 = vrot.slane %v676, %v689
  %v691 = vcombine.high %v607, 0.0
  %v693 = vunpack.c.l.s4 1983009808
  %v694 = vunpack.c.0.s8 %v693
  %v695 = vlaneseq
  %v696 = vshrl.u32 %v695, 7
  %v697 = vsub.s32 %v694, %v696
  %v698 = vrot.slane %v607, %v697
  %v700 = vunpack.c.l.s4 1983009808
  %v701 = vunpack.c.0.s8 %v700
  %v702 = vlaneseq
  %v703 = vshrl.u32 %v702, 7
  %v704 = vsub.s32 %v701, %v703
  %v705 = vrot.slane %v691, %v704
  %v706 = vcombine.low %v683, %v698
  %v707 = vcombine.high %v683, %v698
  %v709 = vunpack.c.l.s4 1934713408
  %v710 = vunpack.c.0.s8 %v709
  %v711 = vlaneseq
  %v712 = vshrl.u32 %v711, 7
  %v713 = vsub.s32 %v710, %v712
  %v714 = vrot.slane %v706, %v713
  %v716 = vunpack.c.l.s4 1934713408
  %v717 = vunpack.c.0.s8 %v716
  %v718 = vlaneseq
  %v719 = vshrl.u32 %v718, 7
  %v720 = vsub.s32 %v717, %v719
  %v721 = vrot.slane %v707, %v720
  %v722 = vcombine.low %v690, %v705
  %v723 = vcombine.high %v690, %v705
  %v725 = vunpack.c.l.s4 1934713408
  %v726 = vunpack.c.0.s8 %v725
  %v727 = vlaneseq
  %v728 = vshrl.u32 %v727, 7
  %v729 = vsub.s32 %v726, %v728
  %v730 = vrot.slane %v722, %v729
  %v732 = vunpack.c.l.s4 1934713408
  %v733 = vunpack.c.0.s8 %v732
  %v734 = vlaneseq
  %v735 = vshrl.u32 %v734, 7
  %v736 = vsub.s32 %v733, %v735
  %v737 = vrot.slane %v723, %v736
  %v738 = vcombine.high %v714, 0.0
  %v739 = vcombine.high %v721, 0.0
  %v740 = vcombine.high %v730, 0.0
  %v741 = vcombine.high %v737, 0.0
  %v742 = vcombine.high %v604, 0.0
  %v744 = vunpack.c.l.s4 1983009808
  %v745 = vunpack.c.0.s8 %v744
  %v746 = vlaneseq
  %v747 = vshrl.u32 %v746, 7
  %v748 = vsub.s32 %v745, %v747
  %v749 = vrot.slane %v604, %v748
  %v751 = vunpack.c.l.s4 1983009808
  %v752 = vunpack.c.0.s8 %v751
  %v753 = vlaneseq
  %v754 = vshrl.u32 %v753, 7
  %v755 = vsub.s32 %v752, %v754
  %v756 = vrot.slane %v742, %v755
  %v757 = vcombine.high %v608, 0.0
  %v759 = vunpack.c.l.s4 1983009808
  %v760 = vunpack.c.0.s8 %v759
  %v761 = vlaneseq
  %v762 = vshrl.u32 %v761, 7
  %v763 = vsub.s32 %v760, %v762
  %v764 = vrot.slane %v608, %v763
  %v766 = vunpack.c.l.s4 1983009808
  %v767 = vunpack.c.0.s8 %v766
  %v768 = vlaneseq
  %v769 = vshrl.u32 %v768, 7
  %v770 = vsub.s32 %v767, %v769
  %v771 = vrot.slane %v757, %v770
  %v772 = vcombine.low %v749, %v764
  %v773 = vcombine.high %v749, %v764
  %v775 = vunpack.c.l.s4 1934713408
  %v776 = vunpack.c.0.s8 %v775
  %v777 = vlaneseq
  %v778 = vshrl.u32 %v777, 7
  %v779 = vsub.s32 %v776, %v778
  %v780 = vrot.slane %v772, %v779
  %v782 = vunpack.c.l.s4 1934713408
  %v783 = vunpack.c.0.s8 %v782
  %v784 = vlaneseq
  %v785 = vshrl.u32 %v784, 7
  %v786 = vsub.s32 %v783, %v785
  %v787 = vrot.slane %v773, %v786
  %v788 = vcombine.low %v756, %v771
  %v789 = vcombine.high %v756, %v771
  %v791 = vunpack.c.l.s4 1934713408
  %v792 = vunpack.c.0.s8 %v791
  %v793 = vlaneseq
  %v794 = vshrl.u32 %v793, 7
  %v795 = vsub.s32 %v792, %v794
  %v796 = vrot.slane %v788, %v795
  %v798 = vunpack.c.l.s4 1934713408
  %v799 = vunpack.c.0.s8 %v798
  %v800 = vlaneseq
  %v801 = vshrl.u32 %v800, 7
  %v802 = vsub.s32 %v799, %v801
  %v803 = vrot.slane %v789, %v802
  %v804 = vcombine.high %v780, 0.0
  %v805 = vcombine.high %v787, 0.0
  %v806 = vcombine.high %v796, 0.0
  %v807 = vcombine.high %v803, 0.0
  %v808 = vcombine.high %v605, 0.0
  %v810 = vunpack.c.l.s4 1983009808
  %v811 = vunpack.c.0.s8 %v810
  %v812 = vlaneseq
  %v813 = vshrl.u32 %v812, 7
  %v814 = vsub.s32 %v811, %v813
  %v815 = vrot.slane %v605, %v814
  %v817 = vunpack.c.l.s4 1983009808
  %v818 = vunpack.c.0.s8 %v817
  %v819 = vlaneseq
  %v820 = vshrl.u32 %v819, 7
  %v821 = vsub.s32 %v818, %v820
  %v822 = vrot.slane %v808, %v821
  %v823 = vcombine.high %v609, 0.0
  %v825 = vunpack.c.l.s4 1983009808
  %v826 = vunpack.c.0.s8 %v825
  %v827 = vlaneseq
  %v828 = vshrl.u32 %v827, 7
  %v829 = vsub.s32 %v826, %v828
  %v830 = vrot.slane %v609, %v829
  %v832 = vunpack.c.l.s4 1983009808
  %v833 = vunpack.c.0.s8 %v832
  %v834 = vlaneseq
  %v835 = vshrl.u32 %v834, 7
  %v836 = vsub.s32 %v833, %v835
  %v837 = vrot.slane %v823, %v836
  %v838 = vcombine.low %v815, %v830
  %v839 = vcombine.high %v815, %v830
  %v841 = vunpack.c.l.s4 1934713408
  %v842 = vunpack.c.0.s8 %v841
  %v843 = vlaneseq
  %v844 = vshrl.u32 %v843, 7
  %v845 = vsub.s32 %v842, %v844
  %v846 = vrot.slane %v838, %v845
  %v848 = vunpack.c.l.s4 1934713408
  %v849 = vunpack.c.0.s8 %v848
  %v850 = vlaneseq
  %v851 = vshrl.u32 %v850, 7
  %v852 = vsub.s32 %v849, %v851
  %v853 = vrot.slane %v839, %v852
  %v854 = vcombine.low %v822, %v837
  %v855 = vcombine.high %v822, %v837
  %v857 = vunpack.c.l.s4 1934713408
  %v858 = vunpack.c.0.s8 %v857
  %v859 = vlaneseq
  %v860 = vshrl.u32 %v859, 7
  %v861 = vsub.s32 %v858, %v860
  %v862 = vrot.slane %v854, %v861
  %v864 = vunpack.c.l.s4 1934713408
  %v865 = vunpack.c.0.s8 %v864
  %v866 = vlaneseq
  %v867 = vshrl.u32 %v866, 7
  %v868 = vsub.s32 %v865, %v867
  %v869 = vrot.slane %v855, %v868
  %v870 = vcombine.high %v846, 0.0
  %v871 = vcombine.high %v853, 0.0
  %v872 = vcombine.high %v862, 0.0
  %v873 = vcombine.high %v869, 0.0
  %v874 = vcombine.low %v648, %v655
  %v876 = vunpack.c.l.s4 1983009808
  %v877 = vunpack.c.0.s8 %v876
  %v878 = vlaneseq
  %v879 = vshrl.u32 %v878, 7
  %v880 = vsub.s32 %v877, %v879
  %v881 = vrot.slane %v874, %v880
  %v882 = vcombine.low %v672, %v673
  %v884 = vunpack.c.l.s4 1983009808
  %v885 = vunpack.c.0.s8 %v884
  %v886 = vlaneseq
  %v887 = vshrl.u32 %v886, 7
  %v888 = vsub.s32 %v885, %v887
  %v889 = vrot.slane %v882, %v888
  %v890 = vcombine.low %v664, %v671
  %v892 = vunpack.c.l.s4 1983009808
  %v893 = vunpack.c.0.s8 %v892
  %v894 = vlaneseq
  %v895 = vshrl.u32 %v894, 7
  %v896 = vsub.s32 %v893, %v895
  %v897 = vrot.slane %v890, %v896
  %v898 = vcombine.low %v674, %v675
  %v900 = vunpack.c.l.s4 1983009808
  %v901 = vunpack.c.0.s8 %v900
  %v902 = vlaneseq
  %v903 = vshrl.u32 %v902, 7
  %v904 = vsub.s32 %v901, %v903
  %v905 = vrot.slane %v898, %v904
  %v906 = vcombine.low %v881, %v889
  %v908 = vunpack.c.l.s4 1934713408
  %v909 = vunpack.c.0.s8 %v908
  %v910 = vlaneseq
  %v911 = vshrl.u32 %v910, 7
  %v912 = vsub.s32 %v909, %v911
  %v913 = vrot.slane %v906, %v912
  %v914 = vcombine.low %v897, %v905
  %v916 = vunpack.c.l.s4 1934713408
  %v917 = vunpack.c.0.s8 %v916
  %v918 = vlaneseq
  %v919 = vshrl.u32 %v918, 7
  %v920 = vsub.s32 %v917, %v919
  %v921 = vrot.slane %v914, %v920
  %v922 = vcombine.low %v913, %v921
  %v923 = vcombine.high %v913, %v921
  %v924 = vcombine.low %v714, %v721
  %v926 = vunpack.c.l.s4 1983009808
  %v927 = vunpack.c.0.s8 %v926
  %v928 = vlaneseq
  %v929 = vshrl.u32 %v928, 7
  %v930 = vsub.s32 %v927, %v929
  %v931 = vrot.slane %v924, %v930
  %v932 = vcombine.low %v738, %v739
  %v934 = vunpack.c.l.s4 1983009808
  %v935 = vunpack.c.0.s8 %v934
  %v936 = vlaneseq
  %v937 = vshrl.u32 %v936, 7
  %v938 = vsub.s32 %v935, %v937
  %v939 = vrot.slane %v932, %v938
  %v940 = vcombine.low %v730, %v737
  %v942 = vunpack.c.l.s4 1983009808
  %v943 = vunpack.c.0.s8 %v942
  %v944 = vlaneseq
  %v945 = vshrl.u32 %v944, 7
  %v946 = vsub.s32 %v943, %v945
  %v947 = vrot.slane %v940, %v946
  %v948 = vcombine.low %v740, %v741
  %v950 = vunpack.c.l.s4 1983009808
  %v951 = vunpack.c.0.s8 %v950
  %v952 = vlaneseq
  %v953 = vshrl.u32 %v952, 7
  %v954 = vsub.s32 %v951, %v953
  %v955 = vrot.slane %v948, %v954
  %v956 = vcombine.low %v931, %v939
  %v958 = vunpack.c.l.s4 1934713408
  %v959 = vunpack.c.0.s8 %v958
  %v960 = vlaneseq
  %v961 = vshrl.u32 %v960, 7
  %v962 = vsub.s32 %v959, %v961
  %v963 = vrot.slane %v956, %v962
  %v964 = vcombine.low %v947, %v955
  %v966 = vunpack.c.l.s4 1934713408
  %v967 = vunpack.c.0.s8 %v966
  %v968 = vlaneseq
  %v969 = vshrl.u32 %v968, 7
  %v970 = vsub.s32 %v967, %v969
  %v971 = vrot.slane %v964, %v970
  %v972 = vcombine.low %v963, %v971
  %v973 = vcombine.high %v963, %v971
  %v974 = vcombine.low %v780, %v787
  %v976 = vunpack.c.l.s4 1983009808
  %v977 = vunpack.c.0.s8 %v976
  %v978 = vlaneseq
  %v979 = vshrl.u32 %v978, 7
  %v980 = vsub.s32 %v977, %v979
  %v981 = vrot.slane %v974, %v980
  %v982 = vcombine.low %v804, %v805
  %v984 = vunpack.c.l.s4 1983009808
  %v985 = vunpack.c.0.s8 %v984
  %v986 = vlaneseq
  %v987 = vshrl.u32 %v986, 7
  %v988 = vsub.s32 %v985, %v987
  %v989 = vrot.slane %v982, %v988
  %v990 = vcombine.low %v796, %v803
  %v992 = vunpack.c.l.s4 1983009808
  %v993 = vunpack.c.0.s8 %v992
  %v994 = vlaneseq
  %v995 = vshrl.u32 %v994, 7
  %v996 = vsub.s32 %v993, %v995
  %v997 = vrot.slane %v990, %v996
  %v998 = vcombine.low %v806, %v807
  %v1000 = vunpack.c.l.s4 1983009808
  %v1001 = vunpack.c.0.s8 %v1000
  %v1002 = vlaneseq
  %v1003 = vshrl.u32 %v1002, 7
  %v1004 = vsub.s32 %v1001, %v1003
  %v1005 = vrot.slane %v998, %v1004
  %v1006 = vcombine.low %v981, %v989
  %v1008 = vunpack.c.l.s4 1934713408
  %v1009 = vunpack.c.0.s8 %v1008
  %v1010 = vlaneseq
  %v1011 = vshrl.u32 %v1010, 7
  %v1012 = vsub.s32 %v1009, %v1011
  %v1013 = vrot.slane %v1006, %v1012
  %v1014 = vcombine.low %v997, %v1005
  %v1016 = vunpack.c.l.s4 1934713408
  %v1017 = vunpack.c.0.s8 %v1016
  %v1018 = vlaneseq
  %v1019 = vshrl.u32 %v1018, 7
  %v1020 = vsub.s32 %v1017, %v1019
  %v1021 = vrot.slane %v1014, %v1020
  %v1022 = vcombine.low %v1013, %v1021
  %v1023 = vcombine.high %v1013, %v1021
  %v1024 = vcombine.low %v846, %v853
  %v1026 = vunpack.c.l.s4 1983009808
  %v1027 = vunpack.c.0.s8 %v1026
  %v1028 = vlaneseq
  %v1029 = vshrl.u32 %v1028, 7
  %v1030 = vsub.s32 %v1027, %v1029
  %v1031 = vrot.slane %v1024, %v1030
  %v1032 = vcombine.low %v870, %v871
  %v1034 = vunpack.c.l.s4 1983009808
  %v1035 = vunpack.c.0.s8 %v1034
  %v1036 = vlaneseq
  %v1037 = vshrl.u32 %v1036, 7
  %v1038 = vsub.s32 %v1035, %v1037
  %v1039 = vrot.slane %v1032, %v1038
  %v1040 = vcombine.low %v862, %v869
  %v1042 = vunpack.c.l.s4 1983009808
  %v1043 = vunpack.c.0.s8 %v1042
  %v1044 = vlaneseq
  %v1045 = vshrl.u32 %v1044, 7
  %v1046 = vsub.s32 %v1043, %v1045
  %v1047 = vrot.slane %v1040, %v1046
  %v1048 = vcombine.low %v872, %v873
  %v1050 = vunpack.c.l.s4 1983009808
  %v1051 = vunpack.c.0.s8 %v1050
  %v1052 = vlaneseq
  %v1053 = vshrl.u32 %v1052, 7
  %v1054 = vsub.s32 %v1051, %v1053
  %v1055 = vrot.slane %v1048, %v1054
  %v1056 = vcombine.low %v1031, %v1039
  %v1058 = vunpack.c.l.s4 1934713408
  %v1059 = vunpack.c.0.s8 %v1058
  %v1060 = vlaneseq
  %v1061 = vshrl.u32 %v1060, 7
  %v1062 = vsub.s32 %v1059, %v1061
  %v1063 = vrot.slane %v1056, %v1062
  %v1064 = vcombine.low %v1047, %v1055
  %v1066 = vunpack.c.l.s4 1934713408
  %v1067 = vunpack.c.0.s8 %v1066
  %v1068 = vlaneseq
  %v1069 = vshrl.u32 %v1068, 7
  %v1070 = vsub.s32 %v1067, %v1069
  %v1071 = vrot.slane %v1064, %v1070
  %v1072 = vcombine.low %v1063, %v1071
  %v1073 = vcombine.high %v1063, %v1071
  %1078 = vrot.lane.b32.xlu0 %v923, 32
  %v1079 = vpop.permute.xlu0 %1078
  %1080 = vrot.lane.b32.xlu0 %v973, 32
  %v1081 = vpop.permute.xlu0 %1080
  %1082 = vrot.lane.b32.xlu0 %v1023, 32
  %v1083 = vpop.permute.xlu0 %1082
  %1084 = vrot.lane.b32.xlu0 %v1073, 32
  %v1085 = vpop.permute.xlu0 %1084
  %v1090 = vsel %vm396, %v922, %v1079
  %v1091 = vsel %vm396, %v972, %v1081
  %v1092 = vsel %vm396, %v1022, %v1083
  %v1093 = vsel %vm396, %v1072, %v1085
  %v1094 = vcombine.low 0.0, 0.0
  %v1096 = vunpack.c.l.s4 1983009808
  %v1097 = vunpack.c.0.s8 %v1096
  %v1098 = vlaneseq
  %v1099 = vshrl.u32 %v1098, 7
  %v1100 = vsub.s32 %v1097, %v1099
  %v1101 = vrot.slane %v1094, %v1100
  %v1102 = vcombine.low %v1101, %v1101
  %v1104 = vunpack.c.l.s4 1934713408
  %v1105 = vunpack.c.0.s8 %v1104
  %v1106 = vlaneseq
  %v1107 = vshrl.u32 %v1106, 7
  %v1108 = vsub.s32 %v1105, %v1107
  %v1109 = vrot.slane %v1102, %v1108
  %v1110 = vcombine.low %v1109, %v1109
  %v1111 = vcombine.high %v1109, %v1109
  %1113 = vrot.lane.b32.xlu0 %v1111, 32
  %v1114 = vpop.permute.xlu0 %1113
  %v1116 = vsel %vm396, %v1110, %v1114
  %v1118 = vsel %vm396, %v234, 0
  %1120 = vmatprep.subr.mxu0 0.0
  %1121 = vmatpush1.msra.mxu0 0.0
  %1122 = vmatprep.subr.mxu0 0.0
  %1123 = vmatpush1.msra.mxu0 0.0
  %1124 = vmatprep.subr.mxu0 0.0
  %1125 = vmatpush1.msra.mxu0 0.0
  %1126 = vmatprep.subr.mxu0 0.0
  %1127 = vmatpush1.msra.mxu0 0.0
  %1128 = vmatprep.subr.mxu0 0.0
  %1129 = vmatpush1.msra.mxu0 0.0
  %1130 = vmatprep.subr.mxu0 0.0
  %1131 = vmatpush1.msra.mxu0 0.0
  %1132 = vmatprep.subr.mxu0 0.0
  %1133 = vmatpush1.msra.mxu0 0.0
  %1134 = vmatprep.subr.mxu0 0.0
  %1135 = vmatpush1.msra.mxu0 0.0
  %1136 = vmatprep.subr.mxu0 0.0
  %1137 = vmatpush1.msra.mxu0 0.0
  %1138 = vmatprep.subr.mxu0 0.0
  %1139 = vmatpush1.msra.mxu0 0.0
  %1140 = vmatprep.subr.mxu0 0.0
  %1141 = vmatpush1.msra.mxu0 0.0
  %1142 = vmatprep.subr.mxu0 0.0
  %1143 = vmatpush1.msra.mxu0 0.0
  %1144 = vmatprep.subr.mxu0 0.0
  %1145 = vmatpush1.msra.mxu0 %v1093
  %1146 = vmatprep.subr.mxu0 0.0
  %1147 = vmatpush1.msra.mxu0 %v1092
  %1148 = vmatprep.subr.mxu0 0.0
  %1149 = vmatpush1.msra.mxu0 %v1091
  %1150 = vmatprep.subr.mxu0 0.0
  %1151 = vmatpush1.msra.mxu0 %v1090
  %1152 = vmatprep.subr.mxu0 0.0
  %1153 = vmatpush2.msra.mxu0 0.0
  %1154 = vmatprep.subr.mxu0 0.0
  %1155 = vmatpush2.msra.mxu0 0.0
  %1156 = vmatprep.subr.mxu0 0.0
  %1157 = vmatpush2.msra.mxu0 0.0
  %1158 = vmatprep.subr.mxu0 0.0
  %1159 = vmatpush2.msra.mxu0 0.0
  %1160 = vmatprep.subr.mxu0 0.0
  %1161 = vmatpush2.msra.mxu0 0.0
  %1162 = vmatprep.subr.mxu0 0.0
  %1163 = vmatpush2.msra.mxu0 0.0
  %1164 = vmatprep.subr.mxu0 0.0
  %1165 = vmatpush2.msra.mxu0 0.0
  %1166 = vmatprep.subr.mxu0 0.0
  %1167 = vmatpush2.msra.mxu0 0.0
  %1168 = vmatprep.subr.mxu0 0.0
  %1169 = vmatpush2.msra.mxu0 0.0
  %1170 = vmatprep.subr.mxu0 0.0
  %1171 = vmatpush2.msra.mxu0 0.0
  %1172 = vmatprep.subr.mxu0 0.0
  %1173 = vmatpush2.msra.mxu0 0.0
  %1174 = vmatprep.subr.mxu0 0.0
  %1175 = vmatpush2.msra.mxu0 0.0
  %1176 = vmatprep.subr.mxu0 0.0
  %1177 = vmatpush2.msra.mxu0 0.0
  %1178 = vmatprep.subr.mxu0 0.0
  %1179 = vmatpush2.msra.mxu0 0.0
  %1180 = vmatprep.subr.mxu0 0.0
  %1181 = vmatpush2.msra.mxu0 0.0
  %1182 = vmatprep.subr.mxu0 0.0
  %1183 = vmatpush2.msra.mxu0 0.0
  %1184 = vmatprep.mubr.f32.mxu0 0.0
  %1185 = vmatmul.mubr.f32.gmra.mxu0 %v1118
  %v1186 = vpop.f32.mrf.mxu0
  %v1187 = vadd.f32 %v1116, %v1186
  %v1188 = vpop.f32.mrf.mxu0
  %1189 = vdwg.mxu0
  %1191 = vrot.lane.b32.xlu0 %v1187, 96
  %v1192 = vpop.permute.xlu0 %1191
  %v1194 = vcombine.high %v1187, 0.0
  %v1196 = vunpack.c.l.s4 1983009808
  %v1197 = vunpack.c.0.s8 %v1196
  %v1198 = vlaneseq
  %v1199 = vshrl.u32 %v1198, 7
  %v1200 = vsub.s32 %v1197, %v1199
  %v1201 = vrot.slane %v1187, %v1200
  %v1203 = vunpack.c.l.s4 1983009808
  %v1204 = vunpack.c.0.s8 %v1203
  %v1205 = vlaneseq
  %v1206 = vshrl.u32 %v1205, 7
  %v1207 = vsub.s32 %v1204, %v1206
  %v1208 = vrot.slane %v1194, %v1207
  %v1209 = vcombine.high %v1192, 0.0
  %v1211 = vunpack.c.l.s4 1983009808
  %v1212 = vunpack.c.0.s8 %v1211
  %v1213 = vlaneseq
  %v1214 = vshrl.u32 %v1213, 7
  %v1215 = vsub.s32 %v1212, %v1214
  %v1216 = vrot.slane %v1192, %v1215
  %v1218 = vunpack.c.l.s4 1983009808
  %v1219 = vunpack.c.0.s8 %v1218
  %v1220 = vlaneseq
  %v1221 = vshrl.u32 %v1220, 7
  %v1222 = vsub.s32 %v1219, %v1221
  %v1223 = vrot.slane %v1209, %v1222
  %v1224 = vcombine.low %v1201, %v1216
  %v1225 = vcombine.high %v1201, %v1216
  %v1227 = vunpack.c.l.s4 1934713408
  %v1228 = vunpack.c.0.s8 %v1227
  %v1229 = vlaneseq
  %v1230 = vshrl.u32 %v1229, 7
  %v1231 = vsub.s32 %v1228, %v1230
  %v1232 = vrot.slane %v1224, %v1231
  %v1234 = vunpack.c.l.s4 1934713408
  %v1235 = vunpack.c.0.s8 %v1234
  %v1236 = vlaneseq
  %v1237 = vshrl.u32 %v1236, 7
  %v1238 = vsub.s32 %v1235, %v1237
  %v1239 = vrot.slane %v1225, %v1238
  %v1240 = vcombine.low %v1208, %v1223
  %v1241 = vcombine.high %v1208, %v1223
  %v1243 = vunpack.c.l.s4 1934713408
  %v1244 = vunpack.c.0.s8 %v1243
  %v1245 = vlaneseq
  %v1246 = vshrl.u32 %v1245, 7
  %v1247 = vsub.s32 %v1244, %v1246
  %v1248 = vrot.slane %v1240, %v1247
  %v1250 = vunpack.c.l.s4 1934713408
  %v1251 = vunpack.c.0.s8 %v1250
  %v1252 = vlaneseq
  %v1253 = vshrl.u32 %v1252, 7
  %v1254 = vsub.s32 %v1251, %v1253
  %v1255 = vrot.slane %v1241, %v1254
  %v1256 = vcombine.high %v1232, 0.0
  %v1257 = vcombine.high %v1239, 0.0
  %v1258 = vcombine.high %v1248, 0.0
  %v1259 = vcombine.high %v1255, 0.0
  %v1260 = vcombine.low %v1232, %v1239
  %v1262 = vunpack.c.l.s4 1983009808
  %v1263 = vunpack.c.0.s8 %v1262
  %v1264 = vlaneseq
  %v1265 = vshrl.u32 %v1264, 7
  %v1266 = vsub.s32 %v1263, %v1265
  %v1267 = vrot.slane %v1260, %v1266
  %v1268 = vcombine.low %v1256, %v1257
  %v1270 = vunpack.c.l.s4 1983009808
  %v1271 = vunpack.c.0.s8 %v1270
  %v1272 = vlaneseq
  %v1273 = vshrl.u32 %v1272, 7
  %v1274 = vsub.s32 %v1271, %v1273
  %v1275 = vrot.slane %v1268, %v1274
  %v1276 = vcombine.low %v1248, %v1255
  %v1278 = vunpack.c.l.s4 1983009808
  %v1279 = vunpack.c.0.s8 %v1278
  %v1280 = vlaneseq
  %v1281 = vshrl.u32 %v1280, 7
  %v1282 = vsub.s32 %v1279, %v1281
  %v1283 = vrot.slane %v1276, %v1282
  %v1284 = vcombine.low %v1258, %v1259
  %v1286 = vunpack.c.l.s4 1983009808
  %v1287 = vunpack.c.0.s8 %v1286
  %v1288 = vlaneseq
  %v1289 = vshrl.u32 %v1288, 7
  %v1290 = vsub.s32 %v1287, %v1289
  %v1291 = vrot.slane %v1284, %v1290
  %v1292 = vcombine.low %v1267, %v1275
  %v1294 = vunpack.c.l.s4 1934713408
  %v1295 = vunpack.c.0.s8 %v1294
  %v1296 = vlaneseq
  %v1297 = vshrl.u32 %v1296, 7
  %v1298 = vsub.s32 %v1295, %v1297
  %v1299 = vrot.slane %v1292, %v1298
  %v1300 = vcombine.low %v1283, %v1291
  %v1302 = vunpack.c.l.s4 1934713408
  %v1303 = vunpack.c.0.s8 %v1302
  %v1304 = vlaneseq
  %v1305 = vshrl.u32 %v1304, 7
  %v1306 = vsub.s32 %v1303, %v1305
  %v1307 = vrot.slane %v1300, %v1306
  %v1308 = vcombine.low %v1299, %v1307
  %v1309 = vcombine.high %v1299, %v1307
  %v1310 = vlaneseq
  %v1311 = vshrl.u32 %v1310, 7
  %v1312 = vsub.s32 0, %v1311
  %v1313 = vrot.slane %v235, %v1312
  %1315 = vbcast.lane.b32.xlu0 %v1313, 256
  %v1316 = vpop.permute.xlu0 %1315
  %v1317 = vadd.f32 %v1308, %v1316
  %v1318 = vadd.f32 %v1309, %v1316
  %v1319 = vsel %vm396, %v1317, 0.0
  %1320 = vadd.xlane.f32.xlu0 %v1319
  %v1321 = vpop.xlane.xlu0 %1320
  %v1322 = vsel %vm396, %v1318, 0.0
  %1323 = vadd.xlane.f32.xlu0 %v1322
  %v1324 = vpop.xlane.xlu0 %1323
  %v1325 = vrcp.pop 32.0
  %v1326 = vmul.f32 %v1321, %v1325
  %v1327 = vmul.f32 %v1324, %v1325
  %v1328 = vadd.f32 %v1326, %v1327
  %v1329 = vrcp.pop 2.0
  %v1330 = vmul.f32 %v1328, %v1329
  %v1331 = vsub.f32 %v1317, %v1330
  %v1332 = vsub.f32 %v1318, %v1330
  %v1333 = vmul.f32 %v1331, %v1331
  %v1334 = vmul.f32 %v1332, %v1332
  %v1335 = vsel %vm396, %v1333, 0.0
  %1336 = vadd.xlane.f32.xlu0 %v1335
  %v1337 = vpop.xlane.xlu0 %1336
  %v1338 = vsel %vm396, %v1334, 0.0
  %1339 = vadd.xlane.f32.xlu0 %v1338
  %v1340 = vpop.xlane.xlu0 %1339
  %v1341 = vmul.f32 %v1337, %v1325
  %v1342 = vmul.f32 %v1340, %v1325
  %v1343 = vadd.f32 %v1341, %v1342
  %v1344 = vmul.f32 %v1343, %v1329
  %v1345 = vadd.f32 %v1344, 1e-05
  %v1346 = vrsqrt.pop %v1345
  %v1347 = vmul.f32 %v1331, %v1346
  %v1348 = vmul.f32 %v1332, %v1346
  %v1349 = vlaneseq
  %v1350 = vshrl.u32 %v1349, 7
  %v1351 = vsub.s32 0, %v1350
  %v1352 = vrot.slane %v236, %v1351
  %1354 = vbcast.lane.b32.xlu0 %v1352, 256
  %v1355 = vpop.permute.xlu0 %1354
  %v1356 = vmul.f32 %v1347, %v1355
  %v1357 = vmul.f32 %v1348, %v1355
  %v1358 = vlaneseq
  %v1359 = vshrl.u32 %v1358, 7
  %v1360 = vsub.s32 0, %v1359
  %v1361 = vrot.slane %v237, %v1360
  %1363 = vbcast.lane.b32.xlu0 %v1361, 256
  %v1364 = vpop.permute.xlu0 %1363
  %v1365 = vadd.f32 %v1356, %v1364
  %v1366 = vadd.f32 %v1357, %v1364
  %v1367 = vadd.f32 %v1365, 3.0
  %v1368 = vadd.f32 %v1366, 3.0
  %v1369 = vmax.f32 %v1367, 0.0
  %v1370 = vmax.f32 %v1368, 0.0
  %v1371 = vmin.f32 %v1369, 6.0
  %v1372 = vmin.f32 %v1370, 6.0
  %v1373 = vmul.f32 %v1365, %v1371
  %v1374 = vmul.f32 %v1366, %v1372
  %v1375 = vmul.f32 %v1373, 0.16666667
  %v1376 = vmul.f32 %v1374, 0.16666667
  %v1377 = vcombine.high %v1375, 0.0
  %v1379 = vunpack.c.l.s4 1983009808
  %v1380 = vunpack.c.0.s8 %v1379
  %v1381 = vlaneseq
  %v1382 = vshrl.u32 %v1381, 7
  %v1383 = vsub.s32 %v1380, %v1382
  %v1384 = vrot.slane %v1375, %v1383
  %v1386 = vunpack.c.l.s4 1983009808
  %v1387 = vunpack.c.0.s8 %v1386
  %v1388 = vlaneseq
  %v1389 = vshrl.u32 %v1388, 7
  %v1390 = vsub.s32 %v1387, %v1389
  %v1391 = vrot.slane %v1377, %v1390
  %v1392 = vcombine.high %v1376, 0.0
  %v1394 = vunpack.c.l.s4 1983009808
  %v1395 = vunpack.c.0.s8 %v1394
  %v1396 = vlaneseq
  %v1397 = vshrl.u32 %v1396, 7
  %v1398 = vsub.s32 %v1395, %v1397
  %v1399 = vrot.slane %v1376, %v1398
  %v1401 = vunpack.c.l.s4 1983009808
  %v1402 = vunpack.c.0.s8 %v1401
  %v1403 = vlaneseq
  %v1404 = vshrl.u32 %v1403, 7
  %v1405 = vsub.s32 %v1402, %v1404
  %v1406 = vrot.slane %v1392, %v1405
  %v1407 = vcombine.low %v1384, %v1399
  %v1408 = vcombine.high %v1384, %v1399
  %v1410 = vunpack.c.l.s4 1934713408
  %v1411 = vunpack.c.0.s8 %v1410
  %v1412 = vlaneseq
  %v1413 = vshrl.u32 %v1412, 7
  %v1414 = vsub.s32 %v1411, %v1413
  %v1415 = vrot.slane %v1407, %v1414
  %v1417 = vunpack.c.l.s4 1934713408
  %v1418 = vunpack.c.0.s8 %v1417
  %v1419 = vlaneseq
  %v1420 = vshrl.u32 %v1419, 7
  %v1421 = vsub.s32 %v1418, %v1420
  %v1422 = vrot.slane %v1408, %v1421
  %v1423 = vcombine.low %v1391, %v1406
  %v1424 = vcombine.high %v1391, %v1406
  %v1426 = vunpack.c.l.s4 1934713408
  %v1427 = vunpack.c.0.s8 %v1426
  %v1428 = vlaneseq
  %v1429 = vshrl.u32 %v1428, 7
  %v1430 = vsub.s32 %v1427, %v1429
  %v1431 = vrot.slane %v1423, %v1430
  %v1433 = vunpack.c.l.s4 1934713408
  %v1434 = vunpack.c.0.s8 %v1433
  %v1435 = vlaneseq
  %v1436 = vshrl.u32 %v1435, 7
  %v1437 = vsub.s32 %v1434, %v1436
  %v1438 = vrot.slane %v1424, %v1437
  %v1439 = vcombine.high %v1415, 0.0
  %v1440 = vcombine.high %v1422, 0.0
  %v1441 = vcombine.high %v1431, 0.0
  %v1442 = vcombine.high %v1438, 0.0
  %v1443 = vcombine.low %v1415, %v1422
  %v1445 = vunpack.c.l.s4 1983009808
  %v1446 = vunpack.c.0.s8 %v1445
  %v1447 = vlaneseq
  %v1448 = vshrl.u32 %v1447, 7
  %v1449 = vsub.s32 %v1446, %v1448
  %v1450 = vrot.slane %v1443, %v1449
  %v1451 = vcombine.low %v1439, %v1440
  %v1453 = vunpack.c.l.s4 1983009808
  %v1454 = vunpack.c.0.s8 %v1453
  %v1455 = vlaneseq
  %v1456 = vshrl.u32 %v1455, 7
  %v1457 = vsub.s32 %v1454, %v1456
  %v1458 = vrot.slane %v1451, %v1457
  %v1459 = vcombine.low %v1431, %v1438
  %v1461 = vunpack.c.l.s4 1983009808
  %v1462 = vunpack.c.0.s8 %v1461
  %v1463 = vlaneseq
  %v1464 = vshrl.u32 %v1463, 7
  %v1465 = vsub.s32 %v1462, %v1464
  %v1466 = vrot.slane %v1459, %v1465
  %v1467 = vcombine.low %v1441, %v1442
  %v1469 = vunpack.c.l.s4 1983009808
  %v1470 = vunpack.c.0.s8 %v1469
  %v1471 = vlaneseq
  %v1472 = vshrl.u32 %v1471, 7
  %v1473 = vsub.s32 %v1470, %v1472
  %v1474 = vrot.slane %v1467, %v1473
  %v1475 = vcombine.low %v1450, %v1458
  %v1477 = vunpack.c.l.s4 1934713408
  %v1478 = vunpack.c.0.s8 %v1477
  %v1479 = vlaneseq
  %v1480 = vshrl.u32 %v1479, 7
  %v1481 = vsub.s32 %v1478, %v1480
  %v1482 = vrot.slane %v1475, %v1481
  %v1483 = vcombine.low %v1466, %v1474
  %v1485 = vunpack.c.l.s4 1934713408
  %v1486 = vunpack.c.0.s8 %v1485
  %v1487 = vlaneseq
  %v1488 = vshrl.u32 %v1487, 7
  %v1489 = vsub.s32 %v1486, %v1488
  %v1490 = vrot.slane %v1483, %v1489
  %v1491 = vcombine.low %v1482, %v1490
  %v1492 = vcombine.high %v1482, %v1490
  %1494 = vrot.lane.b32.xlu0 %v1492, 16
  %v1495 = vpop.permute.xlu0 %1494
  %v1497 = vsel %vm248, %v1491, %v1495
  %1498 = vrot.lane.b32.xlu0 %v1111, 16
  %v1499 = vpop.permute.xlu0 %1498
  %v1501 = vsel %vm248, %v1110, %v1499
  %vm1502 = vcmask 64512
  %v1504 = vsel %vm1502, %v238, 0
  %v1507 = vsel %vm1502, %v239, 0
  %v1510 = vsel %vm1502, %v240, 0
  %v1513 = vsel %vm1502, %v241, 0
  %1515 = vmatprep.subr.mxu0 0.0
  %1516 = vmatpush1.msra.mxu0 0.0
  %1517 = vmatprep.subr.mxu0 0.0
  %1518 = vmatpush1.msra.mxu0 0.0
  %1519 = vmatprep.subr.mxu0 0.0
  %1520 = vmatpush1.msra.mxu0 0.0
  %1521 = vmatprep.subr.mxu0 0.0
  %1522 = vmatpush1.msra.mxu0 0.0
  %1523 = vmatprep.subr.mxu0 0.0
  %1524 = vmatpush1.msra.mxu0 0.0
  %1525 = vmatprep.subr.mxu0 0.0
  %1526 = vmatpush1.msra.mxu0 0.0
  %1527 = vmatprep.subr.mxu0 0.0
  %1528 = vmatpush1.msra.mxu0 0.0
  %1529 = vmatprep.subr.mxu0 0.0
  %1530 = vmatpush1.msra.mxu0 0.0
  %1531 = vmatprep.subr.mxu0 0.0
  %1532 = vmatpush1.msra.mxu0 0.0
  %1533 = vmatprep.subr.mxu0 0.0
  %1534 = vmatpush1.msra.mxu0 0.0
  %1535 = vmatprep.subr.mxu0 0.0
  %1536 = vmatpush1.msra.mxu0 0.0
  %1537 = vmatprep.subr.mxu0 0.0
  %1538 = vmatpush1.msra.mxu0 0.0
  %1539 = vmatprep.subr.mxu0 0.0
  %1540 = vmatpush1.msra.mxu0 0.0
  %1541 = vmatprep.subr.mxu0 0.0
  %1542 = vmatpush1.msra.mxu0 0.0
  %1543 = vmatprep.subr.mxu0 0.0
  %1544 = vmatpush1.msra.mxu0 0.0
  %1545 = vmatprep.subr.mxu0 0.0
  %1546 = vmatpush1.msra.mxu0 %v1497
  %1547 = vmatprep.subr.mxu0 0.0
  %1548 = vmatpush2.msra.mxu0 0.0
  %1549 = vmatprep.subr.mxu0 0.0
  %1550 = vmatpush2.msra.mxu0 0.0
  %1551 = vmatprep.subr.mxu0 0.0
  %1552 = vmatpush2.msra.mxu0 0.0
  %1553 = vmatprep.subr.mxu0 0.0
  %1554 = vmatpush2.msra.mxu0 0.0
  %1555 = vmatprep.subr.mxu0 0.0
  %1556 = vmatpush2.msra.mxu0 0.0
  %1557 = vmatprep.subr.mxu0 0.0
  %1558 = vmatpush2.msra.mxu0 0.0
  %1559 = vmatprep.subr.mxu0 0.0
  %1560 = vmatpush2.msra.mxu0 0.0
  %1561 = vmatprep.subr.mxu0 0.0
  %1562 = vmatpush2.msra.mxu0 0.0
  %1563 = vmatprep.subr.mxu0 0.0
  %1564 = vmatpush2.msra.mxu0 0.0
  %1565 = vmatprep.subr.mxu0 0.0
  %1566 = vmatpush2.msra.mxu0 0.0
  %1567 = vmatprep.subr.mxu0 0.0
  %1568 = vmatpush2.msra.mxu0 0.0
  %1569 = vmatprep.subr.mxu0 0.0
  %1570 = vmatpush2.msra.mxu0 0.0
  %1571 = vmatprep.subr.mxu0 0.0
  %1572 = vmatpush2.msra.mxu0 0.0
  %1573 = vmatprep.subr.mxu0 0.0
  %1574 = vmatpush2.msra.mxu0 0.0
  %1575 = vmatprep.subr.mxu0 0.0
  %1576 = vmatpush2.msra.mxu0 0.0
  %1577 = vmatprep.subr.mxu0 0.0
  %1578 = vmatpush2.msra.mxu0 0.0
  %1579 = vmatprep.mubr.f32.mxu0 0.0
  %1580 = vmatmul.mubr.f32.gmra.mxu0 %v1504
  %v1581 = vpop.f32.mrf.mxu0
  %v1582 = vadd.f32 %v1501, %v1581
  %v1583 = vpop.f32.mrf.mxu0
  %1584 = vmatprep.mubr.f32.mxu0 0.0
  %1585 = vmatmul.mubr.f32.gmra.mxu0 %v1507
  %v1586 = vpop.f32.mrf.mxu0
  %v1587 = vadd.f32 %v1501, %v1586
  %v1588 = vpop.f32.mrf.mxu0
  %1589 = vmatprep.mubr.f32.mxu0 0.0
  %1590 = vmatmul.mubr.f32.gmra.mxu0 %v1510
  %v1591 = vpop.f32.mrf.mxu0
  %v1592 = vadd.f32 %v1501, %v1591
  %v1593 = vpop.f32.mrf.mxu0
  %1594 = vmatprep.mubr.f32.mxu0 0.0
  %1595 = vmatmul.mubr.f32.gmra.mxu0 %v1513
  %v1596 = vpop.f32.mrf.mxu0
  %v1597 = vadd.f32 %v1501, %v1596
  %v1598 = vpop.f32.mrf.mxu0
  %1599 = vdwg.mxu0
  %1604 = vrot.lane.b32.xlu0 %v1582, 112
  %v1605 = vpop.permute.xlu0 %1604
  %1606 = vrot.lane.b32.xlu0 %v1587, 112
  %v1607 = vpop.permute.xlu0 %1606
  %1608 = vrot.lane.b32.xlu0 %v1592, 112
  %v1609 = vpop.permute.xlu0 %1608
  %1610 = vrot.lane.b32.xlu0 %v1597, 112
  %v1611 = vpop.permute.xlu0 %1610
  %v1616 = vcombine.high %v1582, 0.0
  %v1618 = vunpack.c.l.s4 1983009808
  %v1619 = vunpack.c.0.s8 %v1618
  %v1620 = vlaneseq
  %v1621 = vshrl.u32 %v1620, 7
  %v1622 = vsub.s32 %v1619, %v1621
  %v1623 = vrot.slane %v1582, %v1622
  %v1625 = vunpack.c.l.s4 1983009808
  %v1626 = vunpack.c.0.s8 %v1625
  %v1627 = vlaneseq
  %v1628 = vshrl.u32 %v1627, 7
  %v1629 = vsub.s32 %v1626, %v1628
  %v1630 = vrot.slane %v1616, %v1629
  %v1631 = vcombine.high %v1605, 0.0
  %v1633 = vunpack.c.l.s4 1983009808
  %v1634 = vunpack.c.0.s8 %v1633
  %v1635 = vlaneseq
  %v1636 = vshrl.u32 %v1635, 7
  %v1637 = vsub.s32 %v1634, %v1636
  %v1638 = vrot.slane %v1605, %v1637
  %v1640 = vunpack.c.l.s4 1983009808
  %v1641 = vunpack.c.0.s8 %v1640
  %v1642 = vlaneseq
  %v1643 = vshrl.u32 %v1642, 7
  %v1644 = vsub.s32 %v1641, %v1643
  %v1645 = vrot.slane %v1631, %v1644
  %v1646 = vcombine.low %v1623, %v1638
  %v1647 = vcombine.high %v1623, %v1638
  %v1649 = vunpack.c.l.s4 1934713408
  %v1650 = vunpack.c.0.s8 %v1649
  %v1651 = vlaneseq
  %v1652 = vshrl.u32 %v1651, 7
  %v1653 = vsub.s32 %v1650, %v1652
  %v1654 = vrot.slane %v1646, %v1653
  %v1656 = vunpack.c.l.s4 1934713408
  %v1657 = vunpack.c.0.s8 %v1656
  %v1658 = vlaneseq
  %v1659 = vshrl.u32 %v1658, 7
  %v1660 = vsub.s32 %v1657, %v1659
  %v1661 = vrot.slane %v1647, %v1660
  %v1662 = vcombine.low %v1630, %v1645
  %v1663 = vcombine.high %v1630, %v1645
  %v1665 = vunpack.c.l.s4 1934713408
  %v1666 = vunpack.c.0.s8 %v1665
  %v1667 = vlaneseq
  %v1668 = vshrl.u32 %v1667, 7
  %v1669 = vsub.s32 %v1666, %v1668
  %v1670 = vrot.slane %v1662, %v1669
  %v1672 = vunpack.c.l.s4 1934713408
  %v1673 = vunpack.c.0.s8 %v1672
  %v1674 = vlaneseq
  %v1675 = vshrl.u32 %v1674, 7
  %v1676 = vsub.s32 %v1673, %v1675
  %v1677 = vrot.slane %v1663, %v1676
  %v1678 = vcombine.high %v1654, 0.0
  %v1679 = vcombine.high %v1661, 0.0
  %v1680 = vcombine.high %v1670, 0.0
  %v1681 = vcombine.high %v1677, 0.0
  %v1682 = vcombine.high %v1587, 0.0
  %v1684 = vunpack.c.l.s4 1983009808
  %v1685 = vunpack.c.0.s8 %v1684
  %v1686 = vlaneseq
  %v1687 = vshrl.u32 %v1686, 7
  %v1688 = vsub.s32 %v1685, %v1687
  %v1689 = vrot.slane %v1587, %v1688
  %v1691 = vunpack.c.l.s4 1983009808
  %v1692 = vunpack.c.0.s8 %v1691
  %v1693 = vlaneseq
  %v1694 = vshrl.u32 %v1693, 7
  %v1695 = vsub.s32 %v1692, %v1694
  %v1696 = vrot.slane %v1682, %v1695
  %v1697 = vcombine.high %v1607, 0.0
  %v1699 = vunpack.c.l.s4 1983009808
  %v1700 = vunpack.c.0.s8 %v1699
  %v1701 = vlaneseq
  %v1702 = vshrl.u32 %v1701, 7
  %v1703 = vsub.s32 %v1700, %v1702
  %v1704 = vrot.slane %v1607, %v1703
  %v1706 = vunpack.c.l.s4 1983009808
  %v1707 = vunpack.c.0.s8 %v1706
  %v1708 = vlaneseq
  %v1709 = vshrl.u32 %v1708, 7
  %v1710 = vsub.s32 %v1707, %v1709
  %v1711 = vrot.slane %v1697, %v1710
  %v1712 = vcombine.low %v1689, %v1704
  %v1713 = vcombine.high %v1689, %v1704
  %v1715 = vunpack.c.l.s4 1934713408
  %v1716 = vunpack.c.0.s8 %v1715
  %v1717 = vlaneseq
  %v1718 = vshrl.u32 %v1717, 7
  %v1719 = vsub.s32 %v1716, %v1718
  %v1720 = vrot.slane %v1712, %v1719
  %v1722 = vunpack.c.l.s4 1934713408
  %v1723 = vunpack.c.0.s8 %v1722
  %v1724 = vlaneseq
  %v1725 = vshrl.u32 %v1724, 7
  %v1726 = vsub.s32 %v1723, %v1725
  %v1727 = vrot.slane %v1713, %v1726
  %v1728 = vcombine.low %v1696, %v1711
  %v1729 = vcombine.high %v1696, %v1711
  %v1731 = vunpack.c.l.s4 1934713408
  %v1732 = vunpack.c.0.s8 %v1731
  %v1733 = vlaneseq
  %v1734 = vshrl.u32 %v1733, 7
  %v1735 = vsub.s32 %v1732, %v1734
  %v1736 = vrot.slane %v1728, %v1735
  %v1738 = vunpack.c.l.s4 1934713408
  %v1739 = vunpack.c.0.s8 %v1738
  %v1740 = vlaneseq
  %v1741 = vshrl.u32 %v1740, 7
  %v1742 = vsub.s32 %v1739, %v1741
  %v1743 = vrot.slane %v1729, %v1742
  %v1744 = vcombine.high %v1720, 0.0
  %v1745 = vcombine.high %v1727, 0.0
  %v1746 = vcombine.high %v1736, 0.0
  %v1747 = vcombine.high %v1743, 0.0
  %v1748 = vcombine.high %v1592, 0.0
  %v1750 = vunpack.c.l.s4 1983009808
  %v1751 = vunpack.c.0.s8 %v1750
  %v1752 = vlaneseq
  %v1753 = vshrl.u32 %v1752, 7
  %v1754 = vsub.s32 %v1751, %v1753
  %v1755 = vrot.slane %v1592, %v1754
  %v1757 = vunpack.c.l.s4 1983009808
  %v1758 = vunpack.c.0.s8 %v1757
  %v1759 = vlaneseq
  %v1760 = vshrl.u32 %v1759, 7
  %v1761 = vsub.s32 %v1758, %v1760
  %v1762 = vrot.slane %v1748, %v1761
  %v1763 = vcombine.high %v1609, 0.0
  %v1765 = vunpack.c.l.s4 1983009808
  %v1766 = vunpack.c.0.s8 %v1765
  %v1767 = vlaneseq
  %v1768 = vshrl.u32 %v1767, 7
  %v1769 = vsub.s32 %v1766, %v1768
  %v1770 = vrot.slane %v1609, %v1769
  %v1772 = vunpack.c.l.s4 1983009808
  %v1773 = vunpack.c.0.s8 %v1772
  %v1774 = vlaneseq
  %v1775 = vshrl.u32 %v1774, 7
  %v1776 = vsub.s32 %v1773, %v1775
  %v1777 = vrot.slane %v1763, %v1776
  %v1778 = vcombine.low %v1755, %v1770
  %v1779 = vcombine.high %v1755, %v1770
  %v1781 = vunpack.c.l.s4 1934713408
  %v1782 = vunpack.c.0.s8 %v1781
  %v1783 = vlaneseq
  %v1784 = vshrl.u32 %v1783, 7
  %v1785 = vsub.s32 %v1782, %v1784
  %v1786 = vrot.slane %v1778, %v1785
  %v1788 = vunpack.c.l.s4 1934713408
  %v1789 = vunpack.c.0.s8 %v1788
  %v1790 = vlaneseq
  %v1791 = vshrl.u32 %v1790, 7
  %v1792 = vsub.s32 %v1789, %v1791
  %v1793 = vrot.slane %v1779, %v1792
  %v1794 = vcombine.low %v1762, %v1777
  %v1795 = vcombine.high %v1762, %v1777
  %v1797 = vunpack.c.l.s4 1934713408
  %v1798 = vunpack.c.0.s8 %v1797
  %v1799 = vlaneseq
  %v1800 = vshrl.u32 %v1799, 7
  %v1801 = vsub.s32 %v1798, %v1800
  %v1802 = vrot.slane %v1794, %v1801
  %v1804 = vunpack.c.l.s4 1934713408
  %v1805 = vunpack.c.0.s8 %v1804
  %v1806 = vlaneseq
  %v1807 = vshrl.u32 %v1806, 7
  %v1808 = vsub.s32 %v1805, %v1807
  %v1809 = vrot.slane %v1795, %v1808
  %v1810 = vcombine.high %v1786, 0.0
  %v1811 = vcombine.high %v1793, 0.0
  %v1812 = vcombine.high %v1802, 0.0
  %v1813 = vcombine.high %v1809, 0.0
  %v1814 = vcombine.high %v1597, 0.0
  %v1816 = vunpack.c.l.s4 1983009808
  %v1817 = vunpack.c.0.s8 %v1816
  %v1818 = vlaneseq
  %v1819 = vshrl.u32 %v1818, 7
  %v1820 = vsub.s32 %v1817, %v1819
  %v1821 = vrot.slane %v1597, %v1820
  %v1823 = vunpack.c.l.s4 1983009808
  %v1824 = vunpack.c.0.s8 %v1823
  %v1825 = vlaneseq
  %v1826 = vshrl.u32 %v1825, 7
  %v1827 = vsub.s32 %v1824, %v1826
  %v1828 = vrot.slane %v1814, %v1827
  %v1829 = vcombine.high %v1611, 0.0
  %v1831 = vunpack.c.l.s4 1983009808
  %v1832 = vunpack.c.0.s8 %v1831
  %v1833 = vlaneseq
  %v1834 = vshrl.u32 %v1833, 7
  %v1835 = vsub.s32 %v1832, %v1834
  %v1836 = vrot.slane %v1611, %v1835
  %v1838 = vunpack.c.l.s4 1983009808
  %v1839 = vunpack.c.0.s8 %v1838
  %v1840 = vlaneseq
  %v1841 = vshrl.u32 %v1840, 7
  %v1842 = vsub.s32 %v1839, %v1841
  %v1843 = vrot.slane %v1829, %v1842
  %v1844 = vcombine.low %v1821, %v1836
  %v1845 = vcombine.high %v1821, %v1836
  %v1847 = vunpack.c.l.s4 1934713408
  %v1848 = vunpack.c.0.s8 %v1847
  %v1849 = vlaneseq
  %v1850 = vshrl.u32 %v1849, 7
  %v1851 = vsub.s32 %v1848, %v1850
  %v1852 = vrot.slane %v1844, %v1851
  %v1854 = vunpack.c.l.s4 1934713408
  %v1855 = vunpack.c.0.s8 %v1854
  %v1856 = vlaneseq
  %v1857 = vshrl.u32 %v1856, 7
  %v1858 = vsub.s32 %v1855, %v1857
  %v1859 = vrot.slane %v1845, %v1858
  %v1860 = vcombine.low %v1828, %v1843
  %v1861 = vcombine.high %v1828, %v1843
  %v1863 = vunpack.c.l.s4 1934713408
  %v1864 = vunpack.c.0.s8 %v1863
  %v1865 = vlaneseq
  %v1866 = vshrl.u32 %v1865, 7
  %v1867 = vsub.s32 %v1864, %v1866
  %v1868 = vrot.slane %v1860, %v1867
  %v1870 = vunpack.c.l.s4 1934713408
  %v1871 = vunpack.c.0.s8 %v1870
  %v1872 = vlaneseq
  %v1873 = vshrl.u32 %v1872, 7
  %v1874 = vsub.s32 %v1871, %v1873
  %v1875 = vrot.slane %v1861, %v1874
  %v1876 = vcombine.high %v1852, 0.0
  %v1877 = vcombine.high %v1859, 0.0
  %v1878 = vcombine.high %v1868, 0.0
  %v1879 = vcombine.high %v1875, 0.0
  %v1880 = vcombine.low %v1654, %v1661
  %v1882 = vunpack.c.l.s4 1983009808
  %v1883 = vunpack.c.0.s8 %v1882
  %v1884 = vlaneseq
  %v1885 = vshrl.u32 %v1884, 7
  %v1886 = vsub.s32 %v1883, %v1885
  %v1887 = vrot.slane %v1880, %v1886
  %v1888 = vcombine.low %v1678, %v1679
  %v1890 = vunpack.c.l.s4 1983009808
  %v1891 = vunpack.c.0.s8 %v1890
  %v1892 = vlaneseq
  %v1893 = vshrl.u32 %v1892, 7
  %v1894 = vsub.s32 %v1891, %v1893
  %v1895 = vrot.slane %v1888, %v1894
  %v1896 = vcombine.low %v1670, %v1677
  %v1898 = vunpack.c.l.s4 1983009808
  %v1899 = vunpack.c.0.s8 %v1898
  %v1900 = vlaneseq
  %v1901 = vshrl.u32 %v1900, 7
  %v1902 = vsub.s32 %v1899, %v1901
  %v1903 = vrot.slane %v1896, %v1902
  %v1904 = vcombine.low %v1680, %v1681
  %v1906 = vunpack.c.l.s4 1983009808
  %v1907 = vunpack.c.0.s8 %v1906
  %v1908 = vlaneseq
  %v1909 = vshrl.u32 %v1908, 7
  %v1910 = vsub.s32 %v1907, %v1909
  %v1911 = vrot.slane %v1904, %v1910
  %v1912 = vcombine.low %v1887, %v1895
  %v1914 = vunpack.c.l.s4 1934713408
  %v1915 = vunpack.c.0.s8 %v1914
  %v1916 = vlaneseq
  %v1917 = vshrl.u32 %v1916, 7
  %v1918 = vsub.s32 %v1915, %v1917
  %v1919 = vrot.slane %v1912, %v1918
  %v1920 = vcombine.low %v1903, %v1911
  %v1922 = vunpack.c.l.s4 1934713408
  %v1923 = vunpack.c.0.s8 %v1922
  %v1924 = vlaneseq
  %v1925 = vshrl.u32 %v1924, 7
  %v1926 = vsub.s32 %v1923, %v1925
  %v1927 = vrot.slane %v1920, %v1926
  %v1928 = vcombine.low %v1919, %v1927
  %v1929 = vcombine.high %v1919, %v1927
  %v1930 = vcombine.low %v1720, %v1727
  %v1932 = vunpack.c.l.s4 1983009808
  %v1933 = vunpack.c.0.s8 %v1932
  %v1934 = vlaneseq
  %v1935 = vshrl.u32 %v1934, 7
  %v1936 = vsub.s32 %v1933, %v1935
  %v1937 = vrot.slane %v1930, %v1936
  %v1938 = vcombine.low %v1744, %v1745
  %v1940 = vunpack.c.l.s4 1983009808
  %v1941 = vunpack.c.0.s8 %v1940
  %v1942 = vlaneseq
  %v1943 = vshrl.u32 %v1942, 7
  %v1944 = vsub.s32 %v1941, %v1943
  %v1945 = vrot.slane %v1938, %v1944
  %v1946 = vcombine.low %v1736, %v1743
  %v1948 = vunpack.c.l.s4 1983009808
  %v1949 = vunpack.c.0.s8 %v1948
  %v1950 = vlaneseq
  %v1951 = vshrl.u32 %v1950, 7
  %v1952 = vsub.s32 %v1949, %v1951
  %v1953 = vrot.slane %v1946, %v1952
  %v1954 = vcombine.low %v1746, %v1747
  %v1956 = vunpack.c.l.s4 1983009808
  %v1957 = vunpack.c.0.s8 %v1956
  %v1958 = vlaneseq
  %v1959 = vshrl.u32 %v1958, 7
  %v1960 = vsub.s32 %v1957, %v1959
  %v1961 = vrot.slane %v1954, %v1960
  %v1962 = vcombine.low %v1937, %v1945
  %v1964 = vunpack.c.l.s4 1934713408
  %v1965 = vunpack.c.0.s8 %v1964
  %v1966 = vlaneseq
  %v1967 = vshrl.u32 %v1966, 7
  %v1968 = vsub.s32 %v1965, %v1967
  %v1969 = vrot.slane %v1962, %v1968
  %v1970 = vcombine.low %v1953, %v1961
  %v1972 = vunpack.c.l.s4 1934713408
  %v1973 = vunpack.c.0.s8 %v1972
  %v1974 = vlaneseq
  %v1975 = vshrl.u32 %v1974, 7
  %v1976 = vsub.s32 %v1973, %v1975
  %v1977 = vrot.slane %v1970, %v1976
  %v1978 = vcombine.low %v1969, %v1977
  %v1979 = vcombine.high %v1969, %v1977
  %v1980 = vcombine.low %v1786, %v1793
  %v1982 = vunpack.c.l.s4 1983009808
  %v1983 = vunpack.c.0.s8 %v1982
  %v1984 = vlaneseq
  %v1985 = vshrl.u32 %v1984, 7
  %v1986 = vsub.s32 %v1983, %v1985
  %v1987 = vrot.slane %v1980, %v1986
  %v1988 = vcombine.low %v1810, %v1811
  %v1990 = vunpack.c.l.s4 1983009808
  %v1991 = vunpack.c.0.s8 %v1990
  %v1992 = vlaneseq
  %v1993 = vshrl.u32 %v1992, 7
  %v1994 = vsub.s32 %v1991, %v1993
  %v1995 = vrot.slane %v1988, %v1994
  %v1996 = vcombine.low %v1802, %v1809
  %v1998 = vunpack.c.l.s4 1983009808
  %v1999 = vunpack.c.0.s8 %v1998
  %v2000 = vlaneseq
  %v2001 = vshrl.u32 %v2000, 7
  %v2002 = vsub.s32 %v1999, %v2001
  %v2003 = vrot.slane %v1996, %v2002
  %v2004 = vcombine.low %v1812, %v1813
  %v2006 = vunpack.c.l.s4 1983009808
  %v2007 = vunpack.c.0.s8 %v2006
  %v2008 = vlaneseq
  %v2009 = vshrl.u32 %v2008, 7
  %v2010 = vsub.s32 %v2007, %v2009
  %v2011 = vrot.slane %v2004, %v2010
  %v2012 = vcombine.low %v1987, %v1995
  %v2014 = vunpack.c.l.s4 1934713408
  %v2015 = vunpack.c.0.s8 %v2014
  %v2016 = vlaneseq
  %v2017 = vshrl.u32 %v2016, 7
  %v2018 = vsub.s32 %v2015, %v2017
  %v2019 = vrot.slane %v2012, %v2018
  %v2020 = vcombine.low %v2003, %v2011
  %v2022 = vunpack.c.l.s4 1934713408
  %v2023 = vunpack.c.0.s8 %v2022
  %v2024 = vlaneseq
  %v2025 = vshrl.u32 %v2024, 7
  %v2026 = vsub.s32 %v2023, %v2025
  %v2027 = vrot.slane %v2020, %v2026
  %v2028 = vcombine.low %v2019, %v2027
  %v2029 = vcombine.high %v2019, %v2027
  %v2030 = vcombine.low %v1852, %v1859
  %v2032 = vunpack.c.l.s4 1983009808
  %v2033 = vunpack.c.0.s8 %v2032
  %v2034 = vlaneseq
  %v2035 = vshrl.u32 %v2034, 7
  %v2036 = vsub.s32 %v2033, %v2035
  %v2037 = vrot.slane %v2030, %v2036
  %v2038 = vcombine.low %v1876, %v1877
  %v2040 = vunpack.c.l.s4 1983009808
  %v2041 = vunpack.c.0.s8 %v2040
  %v2042 = vlaneseq
  %v2043 = vshrl.u32 %v2042, 7
  %v2044 = vsub.s32 %v2041, %v2043
  %v2045 = vrot.slane %v2038, %v2044
  %v2046 = vcombine.low %v1868, %v1875
  %v2048 = vunpack.c.l.s4 1983009808
  %v2049 = vunpack.c.0.s8 %v2048
  %v2050 = vlaneseq
  %v2051 = vshrl.u32 %v2050, 7
  %v2052 = vsub.s32 %v2049, %v2051
  %v2053 = vrot.slane %v2046, %v2052
  %v2054 = vcombine.low %v1878, %v1879
  %v2056 = vunpack.c.l.s4 1983009808
  %v2057 = vunpack.c.0.s8 %v2056
  %v2058 = vlaneseq
  %v2059 = vshrl.u32 %v2058, 7
  %v2060 = vsub.s32 %v2057, %v2059
  %v2061 = vrot.slane %v2054, %v2060
  %v2062 = vcombine.low %v2037, %v2045
  %v2064 = vunpack.c.l.s4 1934713408
  %v2065 = vunpack.c.0.s8 %v2064
  %v2066 = vlaneseq
  %v2067 = vshrl.u32 %v2066, 7
  %v2068 = vsub.s32 %v2065, %v2067
  %v2069 = vrot.slane %v2062, %v2068
  %v2070 = vcombine.low %v2053, %v2061
  %v2072 = vunpack.c.l.s4 1934713408
  %v2073 = vunpack.c.0.s8 %v2072
  %v2074 = vlaneseq
  %v2075 = vshrl.u32 %v2074, 7
  %v2076 = vsub.s32 %v2073, %v2075
  %v2077 = vrot.slane %v2070, %v2076
  %v2078 = vcombine.low %v2069, %v2077
  %v2079 = vcombine.high %v2069, %v2077
  %v2080 = vlaneseq
  %v2081 = vshrl.u32 %v2080, 7
  %v2082 = vsub.s32 0, %v2081
  %v2083 = vrot.slane %v242, %v2082
  %2085 = vbcast.lane.b32.xlu0 %v2083, 256
  %v2086 = vpop.permute.xlu0 %2085
  %s2088 = sor.u32 256, 8
  %2089 = vbcast.lane.b32.xlu0 %v2083, %s2088
  %v2090 = vpop.permute.xlu0 %2089
  %s2092 = sor.u32 256, 16
  %2093 = vbcast.lane.b32.xlu0 %v2083, %s2092
  %v2094 = vpop.permute.xlu0 %2093
  %s2096 = sor.u32 256, 24
  %2097 = vbcast.lane.b32.xlu0 %v2083, %s2096
  %v2098 = vpop.permute.xlu0 %2097
  %v2099 = vadd.f32 %v1928, %v2086
  %v2100 = vadd.f32 %v1978, %v2090
  %v2101 = vadd.f32 %v2028, %v2094
  %v2102 = vadd.f32 %v2078, %v2098
  %v2103 = vadd.f32 %v1929, %v2086
  %v2104 = vadd.f32 %v1979, %v2090
  %v2105 = vadd.f32 %v2029, %v2094
  %v2106 = vadd.f32 %v2079, %v2098
  %v2107 = vxor.u32 %v2099, 2147483648
  %v2108 = vxor.u32 %v2100, 2147483648
  %v2109 = vxor.u32 %v2101, 2147483648
  %v2110 = vxor.u32 %v2102, 2147483648
  %v2111 = vxor.u32 %v2103, 2147483648
  %v2112 = vxor.u32 %v2104, 2147483648
  %v2113 = vxor.u32 %v2105, 2147483648
  %v2114 = vxor.u32 %v2106, 2147483648
  %v2115 = vmul.f32 %v2107, 1.442695
  %v2116 = vpow.pop %v2115
  %v2117 = vmul.f32 %v2108, 1.442695
  %v2118 = vpow.pop %v2117
  %v2119 = vmul.f32 %v2109, 1.442695
  %v2120 = vpow.pop %v2119
  %v2121 = vmul.f32 %v2110, 1.442695
  %v2122 = vpow.pop %v2121
  %v2123 = vmul.f32 %v2111, 1.442695
  %v2124 = vpow.pop %v2123
  %v2125 = vmul.f32 %v2112, 1.442695
  %v2126 = vpow.pop %v2125
  %v2127 = vmul.f32 %v2113, 1.442695
  %v2128 = vpow.pop %v2127
  %v2129 = vmul.f32 %v2114, 1.442695
  %v2130 = vpow.pop %v2129
  %v2131 = vadd.f32 %v2116, 1.0
  %v2132 = vadd.f32 %v2118, 1.0
  %v2133 = vadd.f32 %v2120, 1.0
  %v2134 = vadd.f32 %v2122, 1.0
  %v2135 = vadd.f32 %v2124, 1.0
  %v2136 = vadd.f32 %v2126, 1.0
  %v2137 = vadd.f32 %v2128, 1.0
  %v2138 = vadd.f32 %v2130, 1.0
  %v2139 = vrcp.pop %v2131
  %v2140 = vmul.f32 1.0, %v2139
  %v2141 = vrcp.pop %v2132
  %v2142 = vmul.f32 1.0, %v2141
  %v2143 = vrcp.pop %v2133
  %v2144 = vmul.f32 1.0, %v2143
  %v2145 = vrcp.pop %v2134
  %v2146 = vmul.f32 1.0, %v2145
  %v2147 = vrcp.pop %v2135
  %v2148 = vmul.f32 1.0, %v2147
  %v2149 = vrcp.pop %v2136
  %v2150 = vmul.f32 1.0, %v2149
  %v2151 = vrcp.pop %v2137
  %v2152 = vmul.f32 1.0, %v2151
  %v2153 = vrcp.pop %v2138
  %v2154 = vmul.f32 1.0, %v2153
  %2157 = vrot.lane.b32.xlu0 %v1375, 112
  %v2158 = vpop.permute.xlu0 %2157
  %2159 = vrot.lane.b32.xlu0 %v1376, 112
  %v2160 = vpop.permute.xlu0 %2159
  %v2163 = vcombine.high %v2158, 0.0
  %v2165 = vunpack.c.l.s4 1983009808
  %v2166 = vunpack.c.0.s8 %v2165
  %v2167 = vlaneseq
  %v2168 = vshrl.u32 %v2167, 7
  %v2169 = vsub.s32 %v2166, %v2168
  %v2170 = vrot.slane %v2158, %v2169
  %v2172 = vunpack.c.l.s4 1983009808
  %v2173 = vunpack.c.0.s8 %v2172
  %v2174 = vlaneseq
  %v2175 = vshrl.u32 %v2174, 7
  %v2176 = vsub.s32 %v2173, %v2175
  %v2177 = vrot.slane %v2163, %v2176
  %v2178 = vcombine.high %v2160, 0.0
  %v2180 = vunpack.c.l.s4 1983009808
  %v2181 = vunpack.c.0.s8 %v2180
  %v2182 = vlaneseq
  %v2183 = vshrl.u32 %v2182, 7
  %v2184 = vsub.s32 %v2181, %v2183
  %v2185 = vrot.slane %v2160, %v2184
  %v2187 = vunpack.c.l.s4 1983009808
  %v2188 = vunpack.c.0.s8 %v2187
  %v2189 = vlaneseq
  %v2190 = vshrl.u32 %v2189, 7
  %v2191 = vsub.s32 %v2188, %v2190
  %v2192 = vrot.slane %v2178, %v2191
  %v2193 = vcombine.low %v2170, %v2185
  %v2194 = vcombine.high %v2170, %v2185
  %v2196 = vunpack.c.l.s4 1934713408
  %v2197 = vunpack.c.0.s8 %v2196
  %v2198 = vlaneseq
  %v2199 = vshrl.u32 %v2198, 7
  %v2200 = vsub.s32 %v2197, %v2199
  %v2201 = vrot.slane %v2193, %v2200
  %v2203 = vunpack.c.l.s4 1934713408
  %v2204 = vunpack.c.0.s8 %v2203
  %v2205 = vlaneseq
  %v2206 = vshrl.u32 %v2205, 7
  %v2207 = vsub.s32 %v2204, %v2206
  %v2208 = vrot.slane %v2194, %v2207
  %v2209 = vcombine.low %v2177, %v2192
  %v2210 = vcombine.high %v2177, %v2192
  %v2212 = vunpack.c.l.s4 1934713408
  %v2213 = vunpack.c.0.s8 %v2212
  %v2214 = vlaneseq
  %v2215 = vshrl.u32 %v2214, 7
  %v2216 = vsub.s32 %v2213, %v2215
  %v2217 = vrot.slane %v2209, %v2216
  %v2219 = vunpack.c.l.s4 1934713408
  %v2220 = vunpack.c.0.s8 %v2219
  %v2221 = vlaneseq
  %v2222 = vshrl.u32 %v2221, 7
  %v2223 = vsub.s32 %v2220, %v2222
  %v2224 = vrot.slane %v2210, %v2223
  %v2225 = vcombine.high %v2201, 0.0
  %v2226 = vcombine.high %v2208, 0.0
  %v2227 = vcombine.high %v2217, 0.0
  %v2228 = vcombine.high %v2224, 0.0
  %v2229 = vcombine.low %v2201, %v2208
  %v2231 = vunpack.c.l.s4 1983009808
  %v2232 = vunpack.c.0.s8 %v2231
  %v2233 = vlaneseq
  %v2234 = vshrl.u32 %v2233, 7
  %v2235 = vsub.s32 %v2232, %v2234
  %v2236 = vrot.slane %v2229, %v2235
  %v2237 = vcombine.low %v2225, %v2226
  %v2239 = vunpack.c.l.s4 1983009808
  %v2240 = vunpack.c.0.s8 %v2239
  %v2241 = vlaneseq
  %v2242 = vshrl.u32 %v2241, 7
  %v2243 = vsub.s32 %v2240, %v2242
  %v2244 = vrot.slane %v2237, %v2243
  %v2245 = vcombine.low %v2217, %v2224
  %v2247 = vunpack.c.l.s4 1983009808
  %v2248 = vunpack.c.0.s8 %v2247
  %v2249 = vlaneseq
  %v2250 = vshrl.u32 %v2249, 7
  %v2251 = vsub.s32 %v2248, %v2250
  %v2252 = vrot.slane %v2245, %v2251
  %v2253 = vcombine.low %v2227, %v2228
  %v2255 = vunpack.c.l.s4 1983009808
  %v2256 = vunpack.c.0.s8 %v2255
  %v2257 = vlaneseq
  %v2258 = vshrl.u32 %v2257, 7
  %v2259 = vsub.s32 %v2256, %v2258
  %v2260 = vrot.slane %v2253, %v2259
  %v2261 = vcombine.low %v2236, %v2244
  %v2263 = vunpack.c.l.s4 1934713408
  %v2264 = vunpack.c.0.s8 %v2263
  %v2265 = vlaneseq
  %v2266 = vshrl.u32 %v2265, 7
  %v2267 = vsub.s32 %v2264, %v2266
  %v2268 = vrot.slane %v2261, %v2267
  %v2269 = vcombine.low %v2252, %v2260
  %v2271 = vunpack.c.l.s4 1934713408
  %v2272 = vunpack.c.0.s8 %v2271
  %v2273 = vlaneseq
  %v2274 = vshrl.u32 %v2273, 7
  %v2275 = vsub.s32 %v2272, %v2274
  %v2276 = vrot.slane %v2269, %v2275
  %v2277 = vcombine.low %v2268, %v2276
  %v2278 = vcombine.high %v2268, %v2276
  %2280 = vrot.lane.b32.xlu0 %v2278, 16
  %v2281 = vpop.permute.xlu0 %2280
  %v2283 = vsel %vm248, %v2277, %v2281
  %v2285 = vsel %vm1502, %v243, 0
  %v2288 = vsel %vm1502, %v244, 0
  %v2291 = vsel %vm1502, %v245, 0
  %v2294 = vsel %vm1502, %v246, 0
  %2296 = vmatprep.subr.mxu0 0.0
  %2297 = vmatpush1.msra.mxu0 0.0
  %2298 = vmatprep.subr.mxu0 0.0
  %2299 = vmatpush1.msra.mxu0 0.0
  %2300 = vmatprep.subr.mxu0 0.0
  %2301 = vmatpush1.msra.mxu0 0.0
  %2302 = vmatprep.subr.mxu0 0.0
  %2303 = vmatpush1.msra.mxu0 0.0
  %2304 = vmatprep.subr.mxu0 0.0
  %2305 = vmatpush1.msra.mxu0 0.0
  %2306 = vmatprep.subr.mxu0 0.0
  %2307 = vmatpush1.msra.mxu0 0.0
  %2308 = vmatprep.subr.mxu0 0.0
  %2309 = vmatpush1.msra.mxu0 0.0
  %2310 = vmatprep.subr.mxu0 0.0
  %2311 = vmatpush1.msra.mxu0 0.0
  %2312 = vmatprep.subr.mxu0 0.0
  %2313 = vmatpush1.msra.mxu0 0.0
  %2314 = vmatprep.subr.mxu0 0.0
  %2315 = vmatpush1.msra.mxu0 0.0
  %2316 = vmatprep.subr.mxu0 0.0
  %2317 = vmatpush1.msra.mxu0 0.0
  %2318 = vmatprep.subr.mxu0 0.0
  %2319 = vmatpush1.msra.mxu0 0.0
  %2320 = vmatprep.subr.mxu0 0.0
  %2321 = vmatpush1.msra.mxu0 0.0
  %2322 = vmatprep.subr.mxu0 0.0
  %2323 = vmatpush1.msra.mxu0 0.0
  %2324 = vmatprep.subr.mxu0 0.0
  %2325 = vmatpush1.msra.mxu0 0.0
  %2326 = vmatprep.subr.mxu0 0.0
  %2327 = vmatpush1.msra.mxu0 %v2283
  %2328 = vmatprep.subr.mxu0 0.0
  %2329 = vmatpush2.msra.mxu0 0.0
  %2330 = vmatprep.subr.mxu0 0.0
  %2331 = vmatpush2.msra.mxu0 0.0
  %2332 = vmatprep.subr.mxu0 0.0
  %2333 = vmatpush2.msra.mxu0 0.0
  %2334 = vmatprep.subr.mxu0 0.0
  %2335 = vmatpush2.msra.mxu0 0.0
  %2336 = vmatprep.subr.mxu0 0.0
  %2337 = vmatpush2.msra.mxu0 0.0
  %2338 = vmatprep.subr.mxu0 0.0
  %2339 = vmatpush2.msra.mxu0 0.0
  %2340 = vmatprep.subr.mxu0 0.0
  %2341 = vmatpush2.msra.mxu0 0.0
  %2342 = vmatprep.subr.mxu0 0.0
  %2343 = vmatpush2.msra.mxu0 0.0
  %2344 = vmatprep.subr.mxu0 0.0
  %2345 = vmatpush2.msra.mxu0 0.0
  %2346 = vmatprep.subr.mxu0 0.0
  %2347 = vmatpush2.msra.mxu0 0.0
  %2348 = vmatprep.subr.mxu0 0.0
  %2349 = vmatpush2.msra.mxu0 0.0
  %2350 = vmatprep.subr.mxu0 0.0
  %2351 = vmatpush2.msra.mxu0 0.0
  %2352 = vmatprep.subr.mxu0 0.0
  %2353 = vmatpush2.msra.mxu0 0.0
  %2354 = vmatprep.subr.mxu0 0.0
  %2355 = vmatpush2.msra.mxu0 0.0
  %2356 = vmatprep.subr.mxu0 0.0
  %2357 = vmatpush2.msra.mxu0 0.0
  %2358 = vmatprep.subr.mxu0 0.0
  %2359 = vmatpush2.msra.mxu0 0.0
  %2360 = vmatprep.mubr.f32.mxu0 0.0
  %2361 = vmatmul.mubr.f32.gmra.mxu0 %v2285
  %v2362 = vpop.f32.mrf.mxu0
  %v2363 = vadd.f32 %v1501, %v2362
  %v2364 = vpop.f32.mrf.mxu0
  %2365 = vmatprep.mubr.f32.mxu0 0.0
  %2366 = vmatmul.mubr.f32.gmra.mxu0 %v2288
  %v2367 = vpop.f32.mrf.mxu0
  %v2368 = vadd.f32 %v1501, %v2367
  %v2369 = vpop.f32.mrf.mxu0
  %2370 = vmatprep.mubr.f32.mxu0 0.0
  %2371 = vmatmul.mubr.f32.gmra.mxu0 %v2291
  %v2372 = vpop.f32.mrf.mxu0
  %v2373 = vadd.f32 %v1501, %v2372
  %v2374 = vpop.f32.mrf.mxu0
  %2375 = vmatprep.mubr.f32.mxu0 0.0
  %2376 = vmatmul.mubr.f32.gmra.mxu0 %v2294
  %v2377 = vpop.f32.mrf.mxu0
  %v2378 = vadd.f32 %v1501, %v2377
  %v2379 = vpop.f32.mrf.mxu0
  %2380 = vdwg.mxu0
  %2385 = vrot.lane.b32.xlu0 %v2363, 112
  %v2386 = vpop.permute.xlu0 %2385
  %2387 = vrot.lane.b32.xlu0 %v2368, 112
  %v2388 = vpop.permute.xlu0 %2387
  %2389 = vrot.lane.b32.xlu0 %v2373, 112
  %v2390 = vpop.permute.xlu0 %2389
  %2391 = vrot.lane.b32.xlu0 %v2378, 112
  %v2392 = vpop.permute.xlu0 %2391
  %v2397 = vcombine.high %v2363, 0.0
  %v2399 = vunpack.c.l.s4 1983009808
  %v2400 = vunpack.c.0.s8 %v2399
  %v2401 = vlaneseq
  %v2402 = vshrl.u32 %v2401, 7
  %v2403 = vsub.s32 %v2400, %v2402
  %v2404 = vrot.slane %v2363, %v2403
  %v2406 = vunpack.c.l.s4 1983009808
  %v2407 = vunpack.c.0.s8 %v2406
  %v2408 = vlaneseq
  %v2409 = vshrl.u32 %v2408, 7
  %v2410 = vsub.s32 %v2407, %v2409
  %v2411 = vrot.slane %v2397, %v2410
  %v2412 = vcombine.high %v2386, 0.0
  %v2414 = vunpack.c.l.s4 1983009808
  %v2415 = vunpack.c.0.s8 %v2414
  %v2416 = vlaneseq
  %v2417 = vshrl.u32 %v2416, 7
  %v2418 = vsub.s32 %v2415, %v2417
  %v2419 = vrot.slane %v2386, %v2418
  %v2421 = vunpack.c.l.s4 1983009808
  %v2422 = vunpack.c.0.s8 %v2421
  %v2423 = vlaneseq
  %v2424 = vshrl.u32 %v2423, 7
  %v2425 = vsub.s32 %v2422, %v2424
  %v2426 = vrot.slane %v2412, %v2425
  %v2427 = vcombine.low %v2404, %v2419
  %v2428 = vcombine.high %v2404, %v2419
  %v2430 = vunpack.c.l.s4 1934713408
  %v2431 = vunpack.c.0.s8 %v2430
  %v2432 = vlaneseq
  %v2433 = vshrl.u32 %v2432, 7
  %v2434 = vsub.s32 %v2431, %v2433
  %v2435 = vrot.slane %v2427, %v2434
  %v2437 = vunpack.c.l.s4 1934713408
  %v2438 = vunpack.c.0.s8 %v2437
  %v2439 = vlaneseq
  %v2440 = vshrl.u32 %v2439, 7
  %v2441 = vsub.s32 %v2438, %v2440
  %v2442 = vrot.slane %v2428, %v2441
  %v2443 = vcombine.low %v2411, %v2426
  %v2444 = vcombine.high %v2411, %v2426
  %v2446 = vunpack.c.l.s4 1934713408
  %v2447 = vunpack.c.0.s8 %v2446
  %v2448 = vlaneseq
  %v2449 = vshrl.u32 %v2448, 7
  %v2450 = vsub.s32 %v2447, %v2449
  %v2451 = vrot.slane %v2443, %v2450
  %v2453 = vunpack.c.l.s4 1934713408
  %v2454 = vunpack.c.0.s8 %v2453
  %v2455 = vlaneseq
  %v2456 = vshrl.u32 %v2455, 7
  %v2457 = vsub.s32 %v2454, %v2456
  %v2458 = vrot.slane %v2444, %v2457
  %v2459 = vcombine.high %v2435, 0.0
  %v2460 = vcombine.high %v2442, 0.0
  %v2461 = vcombine.high %v2451, 0.0
  %v2462 = vcombine.high %v2458, 0.0
  %v2463 = vcombine.high %v2368, 0.0
  %v2465 = vunpack.c.l.s4 1983009808
  %v2466 = vunpack.c.0.s8 %v2465
  %v2467 = vlaneseq
  %v2468 = vshrl.u32 %v2467, 7
  %v2469 = vsub.s32 %v2466, %v2468
  %v2470 = vrot.slane %v2368, %v2469
  %v2472 = vunpack.c.l.s4 1983009808
  %v2473 = vunpack.c.0.s8 %v2472
  %v2474 = vlaneseq
  %v2475 = vshrl.u32 %v2474, 7
  %v2476 = vsub.s32 %v2473, %v2475
  %v2477 = vrot.slane %v2463, %v2476
  %v2478 = vcombine.high %v2388, 0.0
  %v2480 = vunpack.c.l.s4 1983009808
  %v2481 = vunpack.c.0.s8 %v2480
  %v2482 = vlaneseq
  %v2483 = vshrl.u32 %v2482, 7
  %v2484 = vsub.s32 %v2481, %v2483
  %v2485 = vrot.slane %v2388, %v2484
  %v2487 = vunpack.c.l.s4 1983009808
  %v2488 = vunpack.c.0.s8 %v2487
  %v2489 = vlaneseq
  %v2490 = vshrl.u32 %v2489, 7
  %v2491 = vsub.s32 %v2488, %v2490
  %v2492 = vrot.slane %v2478, %v2491
  %v2493 = vcombine.low %v2470, %v2485
  %v2494 = vcombine.high %v2470, %v2485
  %v2496 = vunpack.c.l.s4 1934713408
  %v2497 = vunpack.c.0.s8 %v2496
  %v2498 = vlaneseq
  %v2499 = vshrl.u32 %v2498, 7
  %v2500 = vsub.s32 %v2497, %v2499
  %v2501 = vrot.slane %v2493, %v2500
  %v2503 = vunpack.c.l.s4 1934713408
  %v2504 = vunpack.c.0.s8 %v2503
  %v2505 = vlaneseq
  %v2506 = vshrl.u32 %v2505, 7
  %v2507 = vsub.s32 %v2504, %v2506
  %v2508 = vrot.slane %v2494, %v2507
  %v2509 = vcombine.low %v2477, %v2492
  %v2510 = vcombine.high %v2477, %v2492
  %v2512 = vunpack.c.l.s4 1934713408
  %v2513 = vunpack.c.0.s8 %v2512
  %v2514 = vlaneseq
  %v2515 = vshrl.u32 %v2514, 7
  %v2516 = vsub.s32 %v2513, %v2515
  %v2517 = vrot.slane %v2509, %v2516
  %v2519 = vunpack.c.l.s4 1934713408
  %v2520 = vunpack.c.0.s8 %v2519
  %v2521 = vlaneseq
  %v2522 = vshrl.u32 %v2521, 7
  %v2523 = vsub.s32 %v2520, %v2522
  %v2524 = vrot.slane %v2510, %v2523
  %v2525 = vcombine.high %v2501, 0.0
  %v2526 = vcombine.high %v2508, 0.0
  %v2527 = vcombine.high %v2517, 0.0
  %v2528 = vcombine.high %v2524, 0.0
  %v2529 = vcombine.high %v2373, 0.0
  %v2531 = vunpack.c.l.s4 1983009808
  %v2532 = vunpack.c.0.s8 %v2531
  %v2533 = vlaneseq
  %v2534 = vshrl.u32 %v2533, 7
  %v2535 = vsub.s32 %v2532, %v2534
  %v2536 = vrot.slane %v2373, %v2535
  %v2538 = vunpack.c.l.s4 1983009808
  %v2539 = vunpack.c.0.s8 %v2538
  %v2540 = vlaneseq
  %v2541 = vshrl.u32 %v2540, 7
  %v2542 = vsub.s32 %v2539, %v2541
  %v2543 = vrot.slane %v2529, %v2542
  %v2544 = vcombine.high %v2390, 0.0
  %v2546 = vunpack.c.l.s4 1983009808
  %v2547 = vunpack.c.0.s8 %v2546
  %v2548 = vlaneseq
  %v2549 = vshrl.u32 %v2548, 7
  %v2550 = vsub.s32 %v2547, %v2549
  %v2551 = vrot.slane %v2390, %v2550
  %v2553 = vunpack.c.l.s4 1983009808
  %v2554 = vunpack.c.0.s8 %v2553
  %v2555 = vlaneseq
  %v2556 = vshrl.u32 %v2555, 7
  %v2557 = vsub.s32 %v2554, %v2556
  %v2558 = vrot.slane %v2544, %v2557
  %v2559 = vcombine.low %v2536, %v2551
  %v2560 = vcombine.high %v2536, %v2551
  %v2562 = vunpack.c.l.s4 1934713408
  %v2563 = vunpack.c.0.s8 %v2562
  %v2564 = vlaneseq
  %v2565 = vshrl.u32 %v2564, 7
  %v2566 = vsub.s32 %v2563, %v2565
  %v2567 = vrot.slane %v2559, %v2566
  %v2569 = vunpack.c.l.s4 1934713408
  %v2570 = vunpack.c.0.s8 %v2569
  %v2571 = vlaneseq
  %v2572 = vshrl.u32 %v2571, 7
  %v2573 = vsub.s32 %v2570, %v2572
  %v2574 = vrot.slane %v2560, %v2573
  %v2575 = vcombine.low %v2543, %v2558
  %v2576 = vcombine.high %v2543, %v2558
  %v2578 = vunpack.c.l.s4 1934713408
  %v2579 = vunpack.c.0.s8 %v2578
  %v2580 = vlaneseq
  %v2581 = vshrl.u32 %v2580, 7
  %v2582 = vsub.s32 %v2579, %v2581
  %v2583 = vrot.slane %v2575, %v2582
  %v2585 = vunpack.c.l.s4 1934713408
  %v2586 = vunpack.c.0.s8 %v2585
  %v2587 = vlaneseq
  %v2588 = vshrl.u32 %v2587, 7
  %v2589 = vsub.s32 %v2586, %v2588
  %v2590 = vrot.slane %v2576, %v2589
  %v2591 = vcombine.high %v2567, 0.0
  %v2592 = vcombine.high %v2574, 0.0
  %v2593 = vcombine.high %v2583, 0.0
  %v2594 = vcombine.high %v2590, 0.0
  %v2595 = vcombine.high %v2378, 0.0
  %v2597 = vunpack.c.l.s4 1983009808
  %v2598 = vunpack.c.0.s8 %v2597
  %v2599 = vlaneseq
  %v2600 = vshrl.u32 %v2599, 7
  %v2601 = vsub.s32 %v2598, %v2600
  %v2602 = vrot.slane %v2378, %v2601
  %v2604 = vunpack.c.l.s4 1983009808
  %v2605 = vunpack.c.0.s8 %v2604
  %v2606 = vlaneseq
  %v2607 = vshrl.u32 %v2606, 7
  %v2608 = vsub.s32 %v2605, %v2607
  %v2609 = vrot.slane %v2595, %v2608
  %v2610 = vcombine.high %v2392, 0.0
  %v2612 = vunpack.c.l.s4 1983009808
  %v2613 = vunpack.c.0.s8 %v2612
  %v2614 = vlaneseq
  %v2615 = vshrl.u32 %v2614, 7
  %v2616 = vsub.s32 %v2613, %v2615
  %v2617 = vrot.slane %v2392, %v2616
  %v2619 = vunpack.c.l.s4 1983009808
  %v2620 = vunpack.c.0.s8 %v2619
  %v2621 = vlaneseq
  %v2622 = vshrl.u32 %v2621, 7
  %v2623 = vsub.s32 %v2620, %v2622
  %v2624 = vrot.slane %v2610, %v2623
  %v2625 = vcombine.low %v2602, %v2617
  %v2626 = vcombine.high %v2602, %v2617
  %v2628 = vunpack.c.l.s4 1934713408
  %v2629 = vunpack.c.0.s8 %v2628
  %v2630 = vlaneseq
  %v2631 = vshrl.u32 %v2630, 7
  %v2632 = vsub.s32 %v2629, %v2631
  %v2633 = vrot.slane %v2625, %v2632
  %v2635 = vunpack.c.l.s4 1934713408
  %v2636 = vunpack.c.0.s8 %v2635
  %v2637 = vlaneseq
  %v2638 = vshrl.u32 %v2637, 7
  %v2639 = vsub.s32 %v2636, %v2638
  %v2640 = vrot.slane %v2626, %v2639
  %v2641 = vcombine.low %v2609, %v2624
  %v2642 = vcombine.high %v2609, %v2624
  %v2644 = vunpack.c.l.s4 1934713408
  %v2645 = vunpack.c.0.s8 %v2644
  %v2646 = vlaneseq
  %v2647 = vshrl.u32 %v2646, 7
  %v2648 = vsub.s32 %v2645, %v2647
  %v2649 = vrot.slane %v2641, %v2648
  %v2651 = vunpack.c.l.s4 1934713408
  %v2652 = vunpack.c.0.s8 %v2651
  %v2653 = vlaneseq
  %v2654 = vshrl.u32 %v2653, 7
  %v2655 = vsub.s32 %v2652, %v2654
  %v2656 = vrot.slane %v2642, %v2655
  %v2657 = vcombine.high %v2633, 0.0
  %v2658 = vcombine.high %v2640, 0.0
  %v2659 = vcombine.high %v2649, 0.0
  %v2660 = vcombine.high %v2656, 0.0
  %v2661 = vcombine.low %v2435, %v2442
  %v2663 = vunpack.c.l.s4 1983009808
  %v2664 = vunpack.c.0.s8 %v2663
  %v2665 = vlaneseq
  %v2666 = vshrl.u32 %v2665, 7
  %v2667 = vsub.s32 %v2664, %v2666
  %v2668 = vrot.slane %v2661, %v2667
  %v2669 = vcombine.low %v2459, %v2460
  %v2671 = vunpack.c.l.s4 1983009808
  %v2672 = vunpack.c.0.s8 %v2671
  %v2673 = vlaneseq
  %v2674 = vshrl.u32 %v2673, 7
  %v2675 = vsub.s32 %v2672, %v2674
  %v2676 = vrot.slane %v2669, %v2675
  %v2677 = vcombine.low %v2451, %v2458
  %v2679 = vunpack.c.l.s4 1983009808
  %v2680 = vunpack.c.0.s8 %v2679
  %v2681 = vlaneseq
  %v2682 = vshrl.u32 %v2681, 7
  %v2683 = vsub.s32 %v2680, %v2682
  %v2684 = vrot.slane %v2677, %v2683
  %v2685 = vcombine.low %v2461, %v2462
  %v2687 = vunpack.c.l.s4 1983009808
  %v2688 = vunpack.c.0.s8 %v2687
  %v2689 = vlaneseq
  %v2690 = vshrl.u32 %v2689, 7
  %v2691 = vsub.s32 %v2688, %v2690
  %v2692 = vrot.slane %v2685, %v2691
  %v2693 = vcombine.low %v2668, %v2676
  %v2695 = vunpack.c.l.s4 1934713408
  %v2696 = vunpack.c.0.s8 %v2695
  %v2697 = vlaneseq
  %v2698 = vshrl.u32 %v2697, 7
  %v2699 = vsub.s32 %v2696, %v2698
  %v2700 = vrot.slane %v2693, %v2699
  %v2701 = vcombine.low %v2684, %v2692
  %v2703 = vunpack.c.l.s4 1934713408
  %v2704 = vunpack.c.0.s8 %v2703
  %v2705 = vlaneseq
  %v2706 = vshrl.u32 %v2705, 7
  %v2707 = vsub.s32 %v2704, %v2706
  %v2708 = vrot.slane %v2701, %v2707
  %v2709 = vcombine.low %v2700, %v2708
  %v2710 = vcombine.high %v2700, %v2708
  %v2711 = vcombine.low %v2501, %v2508
  %v2713 = vunpack.c.l.s4 1983009808
  %v2714 = vunpack.c.0.s8 %v2713
  %v2715 = vlaneseq
  %v2716 = vshrl.u32 %v2715, 7
  %v2717 = vsub.s32 %v2714, %v2716
  %v2718 = vrot.slane %v2711, %v2717
  %v2719 = vcombine.low %v2525, %v2526
  %v2721 = vunpack.c.l.s4 1983009808
  %v2722 = vunpack.c.0.s8 %v2721
  %v2723 = vlaneseq
  %v2724 = vshrl.u32 %v2723, 7
  %v2725 = vsub.s32 %v2722, %v2724
  %v2726 = vrot.slane %v2719, %v2725
  %v2727 = vcombine.low %v2517, %v2524
  %v2729 = vunpack.c.l.s4 1983009808
  %v2730 = vunpack.c.0.s8 %v2729
  %v2731 = vlaneseq
  %v2732 = vshrl.u32 %v2731, 7
  %v2733 = vsub.s32 %v2730, %v2732
  %v2734 = vrot.slane %v2727, %v2733
  %v2735 = vcombine.low %v2527, %v2528
  %v2737 = vunpack.c.l.s4 1983009808
  %v2738 = vunpack.c.0.s8 %v2737
  %v2739 = vlaneseq
  %v2740 = vshrl.u32 %v2739, 7
  %v2741 = vsub.s32 %v2738, %v2740
  %v2742 = vrot.slane %v2735, %v2741
  %v2743 = vcombine.low %v2718, %v2726
  %v2745 = vunpack.c.l.s4 1934713408
  %v2746 = vunpack.c.0.s8 %v2745
  %v2747 = vlaneseq
  %v2748 = vshrl.u32 %v2747, 7
  %v2749 = vsub.s32 %v2746, %v2748
  %v2750 = vrot.slane %v2743, %v2749
  %v2751 = vcombine.low %v2734, %v2742
  %v2753 = vunpack.c.l.s4 1934713408
  %v2754 = vunpack.c.0.s8 %v2753
  %v2755 = vlaneseq
  %v2756 = vshrl.u32 %v2755, 7
  %v2757 = vsub.s32 %v2754, %v2756
  %v2758 = vrot.slane %v2751, %v2757
  %v2759 = vcombine.low %v2750, %v2758
  %v2760 = vcombine.high %v2750, %v2758
  %v2761 = vcombine.low %v2567, %v2574
  %v2763 = vunpack.c.l.s4 1983009808
  %v2764 = vunpack.c.0.s8 %v2763
  %v2765 = vlaneseq
  %v2766 = vshrl.u32 %v2765, 7
  %v2767 = vsub.s32 %v2764, %v2766
  %v2768 = vrot.slane %v2761, %v2767
  %v2769 = vcombine.low %v2591, %v2592
  %v2771 = vunpack.c.l.s4 1983009808
  %v2772 = vunpack.c.0.s8 %v2771
  %v2773 = vlaneseq
  %v2774 = vshrl.u32 %v2773, 7
  %v2775 = vsub.s32 %v2772, %v2774
  %v2776 = vrot.slane %v2769, %v2775
  %v2777 = vcombine.low %v2583, %v2590
  %v2779 = vunpack.c.l.s4 1983009808
  %v2780 = vunpack.c.0.s8 %v2779
  %v2781 = vlaneseq
  %v2782 = vshrl.u32 %v2781, 7
  %v2783 = vsub.s32 %v2780, %v2782
  %v2784 = vrot.slane %v2777, %v2783
  %v2785 = vcombine.low %v2593, %v2594
  %v2787 = vunpack.c.l.s4 1983009808
  %v2788 = vunpack.c.0.s8 %v2787
  %v2789 = vlaneseq
  %v2790 = vshrl.u32 %v2789, 7
  %v2791 = vsub.s32 %v2788, %v2790
  %v2792 = vrot.slane %v2785, %v2791
  %v2793 = vcombine.low %v2768, %v2776
  %v2795 = vunpack.c.l.s4 1934713408
  %v2796 = vunpack.c.0.s8 %v2795
  %v2797 = vlaneseq
  %v2798 = vshrl.u32 %v2797, 7
  %v2799 = vsub.s32 %v2796, %v2798
  %v2800 = vrot.slane %v2793, %v2799
  %v2801 = vcombine.low %v2784, %v2792
  %v2803 = vunpack.c.l.s4 1934713408
  %v2804 = vunpack.c.0.s8 %v2803
  %v2805 = vlaneseq
  %v2806 = vshrl.u32 %v2805, 7
  %v2807 = vsub.s32 %v2804, %v2806
  %v2808 = vrot.slane %v2801, %v2807
  %v2809 = vcombine.low %v2800, %v2808
  %v2810 = vcombine.high %v2800, %v2808
  %v2811 = vcombine.low %v2633, %v2640
  %v2813 = vunpack.c.l.s4 1983009808
  %v2814 = vunpack.c.0.s8 %v2813
  %v2815 = vlaneseq
  %v2816 = vshrl.u32 %v2815, 7
  %v2817 = vsub.s32 %v2814, %v2816
  %v2818 = vrot.slane %v2811, %v2817
  %v2819 = vcombine.low %v2657, %v2658
  %v2821 = vunpack.c.l.s4 1983009808
  %v2822 = vunpack.c.0.s8 %v2821
  %v2823 = vlaneseq
  %v2824 = vshrl.u32 %v2823, 7
  %v2825 = vsub.s32 %v2822, %v2824
  %v2826 = vrot.slane %v2819, %v2825
  %v2827 = vcombine.low %v2649, %v2656
  %v2829 = vunpack.c.l.s4 1983009808
  %v2830 = vunpack.c.0.s8 %v2829
  %v2831 = vlaneseq
  %v2832 = vshrl.u32 %v2831, 7
  %v2833 = vsub.s32 %v2830, %v2832
  %v2834 = vrot.slane %v2827, %v2833
  %v2835 = vcombine.low %v2659, %v2660
  %v2837 = vunpack.c.l.s4 1983009808
  %v2838 = vunpack.c.0.s8 %v2837
  %v2839 = vlaneseq
  %v2840 = vshrl.u32 %v2839, 7
  %v2841 = vsub.s32 %v2838, %v2840
  %v2842 = vrot.slane %v2835, %v2841
  %v2843 = vcombine.low %v2818, %v2826
  %v2845 = vunpack.c.l.s4 1934713408
  %v2846 = vunpack.c.0.s8 %v2845
  %v2847 = vlaneseq
  %v2848 = vshrl.u32 %v2847, 7
  %v2849 = vsub.s32 %v2846, %v2848
  %v2850 = vrot.slane %v2843, %v2849
  %v2851 = vcombine.low %v2834, %v2842
  %v2853 = vunpack.c.l.s4 1934713408
  %v2854 = vunpack.c.0.s8 %v2853
  %v2855 = vlaneseq
  %v2856 = vshrl.u32 %v2855, 7
  %v2857 = vsub.s32 %v2854, %v2856
  %v2858 = vrot.slane %v2851, %v2857
  %v2859 = vcombine.low %v2850, %v2858
  %v2860 = vcombine.high %v2850, %v2858
  %v2861 = vlaneseq
  %v2862 = vshrl.u32 %v2861, 7
  %v2863 = vsub.s32 0, %v2862
  %v2864 = vrot.slane %v247, %v2863
  %2866 = vbcast.lane.b32.xlu0 %v2864, 256
  %v2867 = vpop.permute.xlu0 %2866
  %s2869 = sor.u32 256, 8
  %2870 = vbcast.lane.b32.xlu0 %v2864, %s2869
  %v2871 = vpop.permute.xlu0 %2870
  %s2873 = sor.u32 256, 16
  %2874 = vbcast.lane.b32.xlu0 %v2864, %s2873
  %v2875 = vpop.permute.xlu0 %2874
  %s2877 = sor.u32 256, 24
  %2878 = vbcast.lane.b32.xlu0 %v2864, %s2877
  %v2879 = vpop.permute.xlu0 %2878
  %v2880 = vadd.f32 %v2709, %v2867
  %v2881 = vadd.f32 %v2759, %v2871
  %v2882 = vadd.f32 %v2809, %v2875
  %v2883 = vadd.f32 %v2859, %v2879
  %v2884 = vadd.f32 %v2710, %v2867
  %v2885 = vadd.f32 %v2760, %v2871
  %v2886 = vadd.f32 %v2810, %v2875
  %v2887 = vadd.f32 %v2860, %v2879
  %v2888 = vxor.u32 %v2880, 2147483648
  %v2889 = vxor.u32 %v2881, 2147483648
  %v2890 = vxor.u32 %v2882, 2147483648
  %v2891 = vxor.u32 %v2883, 2147483648
  %v2892 = vxor.u32 %v2884, 2147483648
  %v2893 = vxor.u32 %v2885, 2147483648
  %v2894 = vxor.u32 %v2886, 2147483648
  %v2895 = vxor.u32 %v2887, 2147483648
  %v2896 = vmul.f32 %v2888, 1.442695
  %v2897 = vpow.pop %v2896
  %v2898 = vmul.f32 %v2889, 1.442695
  %v2899 = vpow.pop %v2898
  %v2900 = vmul.f32 %v2890, 1.442695
  %v2901 = vpow.pop %v2900
  %v2902 = vmul.f32 %v2891, 1.442695
  %v2903 = vpow.pop %v2902
  %v2904 = vmul.f32 %v2892, 1.442695
  %v2905 = vpow.pop %v2904
  %v2906 = vmul.f32 %v2893, 1.442695
  %v2907 = vpow.pop %v2906
  %v2908 = vmul.f32 %v2894, 1.442695
  %v2909 = vpow.pop %v2908
  %v2910 = vmul.f32 %v2895, 1.442695
  %v2911 = vpow.pop %v2910
  %v2912 = vadd.f32 %v2897, 1.0
  %v2913 = vadd.f32 %v2899, 1.0
  %v2914 = vadd.f32 %v2901, 1.0
  %v2915 = vadd.f32 %v2903, 1.0
  %v2916 = vadd.f32 %v2905, 1.0
  %v2917 = vadd.f32 %v2907, 1.0
  %v2918 = vadd.f32 %v2909, 1.0
  %v2919 = vadd.f32 %v2911, 1.0
  %v2920 = vrcp.pop %v2912
  %v2921 = vmul.f32 1.0, %v2920
  %v2922 = vrcp.pop %v2913
  %v2923 = vmul.f32 1.0, %v2922
  %v2924 = vrcp.pop %v2914
  %v2925 = vmul.f32 1.0, %v2924
  %v2926 = vrcp.pop %v2915
  %v2927 = vmul.f32 1.0, %v2926
  %v2928 = vrcp.pop %v2916
  %v2929 = vmul.f32 1.0, %v2928
  %v2930 = vrcp.pop %v2917
  %v2931 = vmul.f32 1.0, %v2930
  %v2932 = vrcp.pop %v2918
  %v2933 = vmul.f32 1.0, %v2932
  %v2934 = vrcp.pop %v2919
  %v2935 = vmul.f32 1.0, %v2934
  %v2936 = vld [vmem:[%s2] sm:$0xff]
  %v2937 = vld [vmem:[%s2 + $0x8] sm:$0xff]
  %v2938 = vld [vmem:[%s2 + $0x10] sm:$0xff]
  %v2939 = vld [vmem:[%s2 + $0x18] sm:$0xff]
  %v2941 = vsel %vm248, %v2140, 0
  %v2944 = vsel %vm248, %v2142, 0
  %v2947 = vsel %vm248, %v2144, 0
  %v2950 = vsel %vm248, %v2146, 0
  %v2953 = vsel %vm248, %v2148, 0
  %v2956 = vsel %vm248, %v2150, 0
  %v2959 = vsel %vm248, %v2152, 0
  %v2962 = vsel %vm248, %v2154, 0
  %2964 = vmatprep.subr.mxu0 0.0
  %2965 = vmatpush1.msra.mxu0 0.0
  %2966 = vmatprep.subr.mxu0 0.0
  %2967 = vmatpush1.msra.mxu0 0.0
  %2968 = vmatprep.subr.mxu0 0.0
  %2969 = vmatpush1.msra.mxu0 0.0
  %2970 = vmatprep.subr.mxu0 0.0
  %2971 = vmatpush1.msra.mxu0 0.0
  %2972 = vmatprep.subr.mxu0 0.0
  %2973 = vmatpush1.msra.mxu0 0.0
  %2974 = vmatprep.subr.mxu0 0.0
  %2975 = vmatpush1.msra.mxu0 0.0
  %2976 = vmatprep.subr.mxu0 0.0
  %2977 = vmatpush1.msra.mxu0 0.0
  %2978 = vmatprep.subr.mxu0 0.0
  %2979 = vmatpush1.msra.mxu0 0.0
  %2980 = vmatprep.subr.mxu0 0.0
  %2981 = vmatpush1.msra.mxu0 0.0
  %2982 = vmatprep.subr.mxu0 0.0
  %2983 = vmatpush1.msra.mxu0 0.0
  %2984 = vmatprep.subr.mxu0 0.0
  %2985 = vmatpush1.msra.mxu0 0.0
  %2986 = vmatprep.subr.mxu0 0.0
  %2987 = vmatpush1.msra.mxu0 0.0
  %2988 = vmatprep.subr.mxu0 0.0
  %2989 = vmatpush1.msra.mxu0 0.0
  %2990 = vmatprep.subr.mxu0 0.0
  %2991 = vmatpush1.msra.mxu0 0.0
  %2992 = vmatprep.subr.mxu0 %v2939
  %2993 = vmatpush1.msra.mxu0 %v2938
  %2994 = vmatprep.subr.mxu0 %v2937
  %2995 = vmatpush1.msra.mxu0 %v2936
  %2996 = vmatprep.subr.mxu0 0.0
  %2997 = vmatpush2.msra.mxu0 0.0
  %2998 = vmatprep.subr.mxu0 0.0
  %2999 = vmatpush2.msra.mxu0 0.0
  %3000 = vmatprep.subr.mxu0 0.0
  %3001 = vmatpush2.msra.mxu0 0.0
  %3002 = vmatprep.subr.mxu0 0.0
  %3003 = vmatpush2.msra.mxu0 0.0
  %3004 = vmatprep.subr.mxu0 0.0
  %3005 = vmatpush2.msra.mxu0 0.0
  %3006 = vmatprep.subr.mxu0 0.0
  %3007 = vmatpush2.msra.mxu0 0.0
  %3008 = vmatprep.subr.mxu0 0.0
  %3009 = vmatpush2.msra.mxu0 0.0
  %3010 = vmatprep.subr.mxu0 0.0
  %3011 = vmatpush2.msra.mxu0 0.0
  %3012 = vmatprep.subr.mxu0 0.0
  %3013 = vmatpush2.msra.mxu0 0.0
  %3014 = vmatprep.subr.mxu0 0.0
  %3015 = vmatpush2.msra.mxu0 0.0
  %3016 = vmatprep.subr.mxu0 0.0
  %3017 = vmatpush2.msra.mxu0 0.0
  %3018 = vmatprep.subr.mxu0 0.0
  %3019 = vmatpush2.msra.mxu0 0.0
  %3020 = vmatprep.subr.mxu0 0.0
  %3021 = vmatpush2.msra.mxu0 0.0
  %3022 = vmatprep.subr.mxu0 0.0
  %3023 = vmatpush2.msra.mxu0 0.0
  %3024 = vmatprep.subr.mxu0 0.0
  %3025 = vmatpush2.msra.mxu0 0.0
  %3026 = vmatprep.subr.mxu0 0.0
  %3027 = vmatpush2.msra.mxu0 0.0
  %3028 = vmatprep.mubr.f32.mxu0 0.0
  %3029 = vmatmul.mubr.f32.gmra.mxu0 %v2941
  %v3030 = vpop.f32.mrf.mxu0
  %v3031 = vadd.f32 0.0, %v3030
  %v3032 = vpop.f32.mrf.mxu0
  %v3033 = vadd.f32 0.0, %v3032
  %3034 = vmatprep.mubr.f32.mxu0 0.0
  %3035 = vmatmul.mubr.f32.gmra.mxu0 %v2944
  %v3036 = vpop.f32.mrf.mxu0
  %v3037 = vadd.f32 0.0, %v3036
  %v3038 = vpop.f32.mrf.mxu0
  %v3039 = vadd.f32 0.0, %v3038
  %3040 = vmatprep.mubr.f32.mxu0 0.0
  %3041 = vmatmul.mubr.f32.gmra.mxu0 %v2947
  %v3042 = vpop.f32.mrf.mxu0
  %v3043 = vadd.f32 0.0, %v3042
  %v3044 = vpop.f32.mrf.mxu0
  %v3045 = vadd.f32 0.0, %v3044
  %3046 = vmatprep.mubr.f32.mxu0 0.0
  %3047 = vmatmul.mubr.f32.gmra.mxu0 %v2950
  %v3048 = vpop.f32.mrf.mxu0
  %v3049 = vadd.f32 0.0, %v3048
  %v3050 = vpop.f32.mrf.mxu0
  %v3051 = vadd.f32 0.0, %v3050
  %3052 = vmatprep.mubr.f32.mxu0 0.0
  %3053 = vmatmul.mubr.f32.gmra.mxu0 %v2953
  %v3054 = vpop.f32.mrf.mxu0
  %v3055 = vadd.f32 0.0, %v3054
  %v3056 = vpop.f32.mrf.mxu0
  %v3057 = vadd.f32 0.0, %v3056
  %3058 = vmatprep.mubr.f32.mxu0 0.0
  %3059 = vmatmul.mubr.f32.gmra.mxu0 %v2956
  %v3060 = vpop.f32.mrf.mxu0
  %v3061 = vadd.f32 0.0, %v3060
  %v3062 = vpop.f32.mrf.mxu0
  %v3063 = vadd.f32 0.0, %v3062
  %3064 = vmatprep.mubr.f32.mxu0 0.0
  %3065 = vmatmul.mubr.f32.gmra.mxu0 %v2959
  %v3066 = vpop.f32.mrf.mxu0
  %v3067 = vadd.f32 0.0, %v3066
  %v3068 = vpop.f32.mrf.mxu0
  %v3069 = vadd.f32 0.0, %v3068
  %3070 = vmatprep.mubr.f32.mxu0 0.0
  %3071 = vmatmul.mubr.f32.gmra.mxu0 %v2962
  %v3072 = vpop.f32.mrf.mxu0
  %v3073 = vadd.f32 0.0, %v3072
  %v3074 = vpop.f32.mrf.mxu0
  %v3075 = vadd.f32 0.0, %v3074
  %3076 = vdwg.mxu0
  %v3077 = vld [vmem:[%s2 + $0x20] sm:$0xff]
  %v3078 = vld [vmem:[%s2 + $0x28] sm:$0xff]
  %v3079 = vld [vmem:[%s2 + $0x30] sm:$0xff]
  %v3080 = vld [vmem:[%s2 + $0x38] sm:$0xff]
  %v3082 = vsel %vm248, %v2921, 0
  %v3085 = vsel %vm248, %v2923, 0
  %v3088 = vsel %vm248, %v2925, 0
  %v3091 = vsel %vm248, %v2927, 0
  %v3094 = vsel %vm248, %v2929, 0
  %v3097 = vsel %vm248, %v2931, 0
  %v3100 = vsel %vm248, %v2933, 0
  %v3103 = vsel %vm248, %v2935, 0
  %3105 = vmatprep.subr.mxu0 0.0
  %3106 = vmatpush1.msra.mxu0 0.0
  %3107 = vmatprep.subr.mxu0 0.0
  %3108 = vmatpush1.msra.mxu0 0.0
  %3109 = vmatprep.subr.mxu0 0.0
  %3110 = vmatpush1.msra.mxu0 0.0
  %3111 = vmatprep.subr.mxu0 0.0
  %3112 = vmatpush1.msra.mxu0 0.0
  %3113 = vmatprep.subr.mxu0 0.0
  %3114 = vmatpush1.msra.mxu0 0.0
  %3115 = vmatprep.subr.mxu0 0.0
  %3116 = vmatpush1.msra.mxu0 0.0
  %3117 = vmatprep.subr.mxu0 0.0
  %3118 = vmatpush1.msra.mxu0 0.0
  %3119 = vmatprep.subr.mxu0 0.0
  %3120 = vmatpush1.msra.mxu0 0.0
  %3121 = vmatprep.subr.mxu0 0.0
  %3122 = vmatpush1.msra.mxu0 0.0
  %3123 = vmatprep.subr.mxu0 0.0
  %3124 = vmatpush1.msra.mxu0 0.0
  %3125 = vmatprep.subr.mxu0 0.0
  %3126 = vmatpush1.msra.mxu0 0.0
  %3127 = vmatprep.subr.mxu0 0.0
  %3128 = vmatpush1.msra.mxu0 0.0
  %3129 = vmatprep.subr.mxu0 0.0
  %3130 = vmatpush1.msra.mxu0 0.0
  %3131 = vmatprep.subr.mxu0 0.0
  %3132 = vmatpush1.msra.mxu0 0.0
  %3133 = vmatprep.subr.mxu0 %v3080
  %3134 = vmatpush1.msra.mxu0 %v3079
  %3135 = vmatprep.subr.mxu0 %v3078
  %3136 = vmatpush1.msra.mxu0 %v3077
  %3137 = vmatprep.subr.mxu0 0.0
  %3138 = vmatpush2.msra.mxu0 0.0
  %3139 = vmatprep.subr.mxu0 0.0
  %3140 = vmatpush2.msra.mxu0 0.0
  %3141 = vmatprep.subr.mxu0 0.0
  %3142 = vmatpush2.msra.mxu0 0.0
  %3143 = vmatprep.subr.mxu0 0.0
  %3144 = vmatpush2.msra.mxu0 0.0
  %3145 = vmatprep.subr.mxu0 0.0
  %3146 = vmatpush2.msra.mxu0 0.0
  %3147 = vmatprep.subr.mxu0 0.0
  %3148 = vmatpush2.msra.mxu0 0.0
  %3149 = vmatprep.subr.mxu0 0.0
  %3150 = vmatpush2.msra.mxu0 0.0
  %3151 = vmatprep.subr.mxu0 0.0
  %3152 = vmatpush2.msra.mxu0 0.0
  %3153 = vmatprep.subr.mxu0 0.0
  %3154 = vmatpush2.msra.mxu0 0.0
  %3155 = vmatprep.subr.mxu0 0.0
  %3156 = vmatpush2.msra.mxu0 0.0
  %3157 = vmatprep.subr.mxu0 0.0
  %3158 = vmatpush2.msra.mxu0 0.0
  %3159 = vmatprep.subr.mxu0 0.0
  %3160 = vmatpush2.msra.mxu0 0.0
  %3161 = vmatprep.subr.mxu0 0.0
  %3162 = vmatpush2.msra.mxu0 0.0
  %3163 = vmatprep.subr.mxu0 0.0
  %3164 = vmatpush2.msra.mxu0 0.0
  %3165 = vmatprep.subr.mxu0 0.0
  %3166 = vmatpush2.msra.mxu0 0.0
  %3167 = vmatprep.subr.mxu0 0.0
  %3168 = vmatpush2.msra.mxu0 0.0
  %3169 = vmatprep.mubr.f32.mxu0 0.0
  %3170 = vmatmul.mubr.f32.gmra.mxu0 %v3082
  %v3171 = vpop.f32.mrf.mxu0
  %v3172 = vadd.f32 0.0, %v3171
  %v3173 = vpop.f32.mrf.mxu0
  %v3174 = vadd.f32 0.0, %v3173
  %3175 = vmatprep.mubr.f32.mxu0 0.0
  %3176 = vmatmul.mubr.f32.gmra.mxu0 %v3085
  %v3177 = vpop.f32.mrf.mxu0
  %v3178 = vadd.f32 0.0, %v3177
  %v3179 = vpop.f32.mrf.mxu0
  %v3180 = vadd.f32 0.0, %v3179
  %3181 = vmatprep.mubr.f32.mxu0 0.0
  %3182 = vmatmul.mubr.f32.gmra.mxu0 %v3088
  %v3183 = vpop.f32.mrf.mxu0
  %v3184 = vadd.f32 0.0, %v3183
  %v3185 = vpop.f32.mrf.mxu0
  %v3186 = vadd.f32 0.0, %v3185
  %3187 = vmatprep.mubr.f32.mxu0 0.0
  %3188 = vmatmul.mubr.f32.gmra.mxu0 %v3091
  %v3189 = vpop.f32.mrf.mxu0
  %v3190 = vadd.f32 0.0, %v3189
  %v3191 = vpop.f32.mrf.mxu0
  %v3192 = vadd.f32 0.0, %v3191
  %3193 = vmatprep.mubr.f32.mxu0 0.0
  %3194 = vmatmul.mubr.f32.gmra.mxu0 %v3094
  %v3195 = vpop.f32.mrf.mxu0
  %v3196 = vadd.f32 0.0, %v3195
  %v3197 = vpop.f32.mrf.mxu0
  %v3198 = vadd.f32 0.0, %v3197
  %3199 = vmatprep.mubr.f32.mxu0 0.0
  %3200 = vmatmul.mubr.f32.gmra.mxu0 %v3097
  %v3201 = vpop.f32.mrf.mxu0
  %v3202 = vadd.f32 0.0, %v3201
  %v3203 = vpop.f32.mrf.mxu0
  %v3204 = vadd.f32 0.0, %v3203
  %3205 = vmatprep.mubr.f32.mxu0 0.0
  %3206 = vmatmul.mubr.f32.gmra.mxu0 %v3100
  %v3207 = vpop.f32.mrf.mxu0
  %v3208 = vadd.f32 0.0, %v3207
  %v3209 = vpop.f32.mrf.mxu0
  %v3210 = vadd.f32 0.0, %v3209
  %3211 = vmatprep.mubr.f32.mxu0 0.0
  %3212 = vmatmul.mubr.f32.gmra.mxu0 %v3103
  %v3213 = vpop.f32.mrf.mxu0
  %v3214 = vadd.f32 0.0, %v3213
  %v3215 = vpop.f32.mrf.mxu0
  %v3216 = vadd.f32 0.0, %v3215
  %3217 = vdwg.mxu0
  %v3218 = vmul.f32 %v50, %v3031
  %v3219 = vmul.f32 %v51, %v3033
  %v3220 = vmul.f32 %v52, %v3037
  %v3221 = vmul.f32 %v53, %v3039
  %v3222 = vmul.f32 %v54, %v3043
  %v3223 = vmul.f32 %v55, %v3045
  %v3224 = vmul.f32 %v56, %v3049
  %v3225 = vmul.f32 %v57, %v3051
  %v3226 = vmul.f32 %v58, %v3055
  %v3227 = vmul.f32 %v59, %v3057
  %v3228 = vmul.f32 %v60, %v3061
  %v3229 = vmul.f32 %v61, %v3063
  %v3230 = vmul.f32 %v62, %v3067
  %v3231 = vmul.f32 %v63, %v3069
  %v3232 = vmul.f32 %v64, %v3073
  %v3233 = vmul.f32 %v65, %v3075
  %v3234 = vmul.f32 %v3218, %v3172
  %v3235 = vmul.f32 %v3219, %v3174
  %v3236 = vmul.f32 %v3220, %v3178
  %v3237 = vmul.f32 %v3221, %v3180
  %v3238 = vmul.f32 %v3222, %v3184
  %v3239 = vmul.f32 %v3223, %v3186
  %v3240 = vmul.f32 %v3224, %v3190
  %v3241 = vmul.f32 %v3225, %v3192
  %v3242 = vmul.f32 %v3226, %v3196
  %v3243 = vmul.f32 %v3227, %v3198
  %v3244 = vmul.f32 %v3228, %v3202
  %v3245 = vmul.f32 %v3229, %v3204
  %v3246 = vmul.f32 %v3230, %v3208
  %v3247 = vmul.f32 %v3231, %v3210
  %v3248 = vmul.f32 %v3232, %v3214
  %v3249 = vmul.f32 %v3233, %v3216
  %3250 = vst [vmem:[%s15] sm:$0xff] %v3234
  %3251 = vst [vmem:[%s15 + $0x8] sm:$0xff] %v3235
  %3252 = vst [vmem:[%s15 + $0x10] sm:$0xff] %v3236
  %3253 = vst [vmem:[%s15 + $0x18] sm:$0xff] %v3237
  %3254 = vst [vmem:[%s15 + $0x20] sm:$0xff] %v3238
  %3255 = vst [vmem:[%s15 + $0x28] sm:$0xff] %v3239
  %3256 = vst [vmem:[%s15 + $0x30] sm:$0xff] %v3240
  %3257 = vst [vmem:[%s15 + $0x38] sm:$0xff] %v3241
  %3258 = vst [vmem:[%s15 + $0x40] sm:$0xff] %v3242
  %3259 = vst [vmem:[%s15 + $0x48] sm:$0xff] %v3243
  %3260 = vst [vmem:[%s15 + $0x50] sm:$0xff] %v3244
  %3261 = vst [vmem:[%s15 + $0x58] sm:$0xff] %v3245
  %3262 = vst [vmem:[%s15 + $0x60] sm:$0xff] %v3246
  %3263 = vst [vmem:[%s15 + $0x68] sm:$0xff] %v3247
  %3264 = vst [vmem:[%s15 + $0x70] sm:$0xff] %v3248
  %3265 = vst [vmem:[%s15 + $0x78] sm:$0xff] %v3249
  // Predicated region
  $region62: #{coord_att.1} parent=0 // pred_check
    _
  $region63: #{coord_att.1} parent=0 // pred_check_branch
    %3267 = sbr.rel (0) target = $region65
  $region64: #{coord_att.1} parent=0 // pred_region
    _
  $region65: #{coord_att.1} parent=0 // pred_fallthru
    _
  // Predicated region
  $region66: #{coord_att.1} parent=0 // pred_check
    _
  $region67: #{coord_att.1} parent=0 // pred_check_branch
    %3269 = sbr.rel (0) target = $region69
  $region68: #{coord_att.1} parent=0 // pred_region
    _
  $region69: #{coord_att.1} parent=0 // pred_fallthru
    _

</llo_original>
